<compile_context>
chip_gen: v7x
topology: tpu7x:2x2x1
jax: 0.10.0
libtpu: 0.0.40
codegen_flags: <defaults>
</compile_context>

<pallas_src>
import functools

import jax
import jax.numpy as jnp
from jax.experimental import pallas as pl
from jax.experimental.pallas import tpu as pltpu


def _emulator_kernel(x_ref,            # (B_BLK*T, F)  rows ordered (b_local, t)
                     wih_ref,          # (F, 4H)  W_ih^T  (layer 0)
                     whh_ref,          # (H, 4H)  W_hh^T  (layer 0)
                     b_ref,            # (1, 4H)  b_ih + b_hh (layer 0)
                     w1_ref,           # (H, 32)  linear1 weight^T
                     b1_ref,           # (1, 32)
                     wout_ref,         # (32, 1)  linear_out weight^T
                     bout_ref,         # (1, 1)
                     out_ref,          # (B_BLK, 1)
                     *, hidden, seq_len, batch_block):
    H, T, Bb = hidden, seq_len, batch_block

    # ---- hoisted input projection: one MXU matmul for all batch*time rows ----
    gx = jnp.dot(x_ref[...], wih_ref[...], preferred_element_type=jnp.float32)
    gx = gx + b_ref[...]                      # bias folded in once, outside the loop
    gx = gx.reshape(Bb, T, 4 * H)             # [b_local, t, 4H]

    whh = whh_ref[...]
    h = jnp.zeros((Bb, H), jnp.float32)
    c = jnp.zeros((Bb, H), jnp.float32)

    # ---- recurrence, fully unrolled (T is small and static) ----
    for t in range(T):
        g = gx[:, t, :] + jnp.dot(h, whh, preferred_element_type=jnp.float32)  # (Bb, 4H)
        sg = jax.nn.sigmoid(g)                # full 128-lane EUP pass
        th = jnp.tanh(g)                      # full 128-lane EUP pass
        i_g = sg[:, 0 * H:1 * H]              # PyTorch gate order: i, f, g, o
        f_g = sg[:, 1 * H:2 * H]
        g_g = th[:, 2 * H:3 * H]
        o_g = sg[:, 3 * H:4 * H]
        c = f_g * c + i_g * g_g
        h = o_g * jnp.tanh(c)

    # ---- fused head: linear1 -> ReLU -> linear_out ----
    y = jnp.dot(h, w1_ref[...], preferred_element_type=jnp.float32) + b1_ref[...]
    y = jnp.maximum(y, 0.0)
    out_ref[...] = (jnp.dot(y, wout_ref[...], preferred_element_type=jnp.float32)
                    + bout_ref[...])


def timeseries_emulator_forward(x, params, *, batch_block=8):
    """x: (B, T, F) float32 batch-first (PyTorch layout). Returns (B, 1)."""
    B, T, F = x.shape
    H = params["w_hh_0"].shape[1]

    # Pad batch to a multiple of 8 sublanes; no transpose (batch-first preserved).
    Bp = ((B + batch_block - 1) // batch_block) * batch_block
    x_pad = jnp.zeros((Bp, T, F), jnp.float32).at[:B].set(x.astype(jnp.float32))
    x2d = x_pad.reshape(Bp * T, F)            # contiguous reshape, row = b*T + t

    wihT = params["w_ih_0"].T                             # (F, 4H)
    whhT = params["w_hh_0"].T                             # (H, 4H)
    b0 = (params["b_ih_0"] + params["b_hh_0"])[None, :]   # (1, 4H)
    w1T = params["w_l1"].T                                # (H, 32)
    bl1 = params["b_l1"][None, :]                         # (1, 32)
    woutT = params["w_out"].T                             # (32, 1)
    bout = params["b_out"][None, :]                       # (1, 1)

    nb = Bp // batch_block
    kernel = functools.partial(_emulator_kernel, hidden=H, seq_len=T,
                               batch_block=batch_block)
    const = lambda i: (0, 0)

    out = pl.pallas_call(
        kernel,
        out_shape=jax.ShapeDtypeStruct((Bp, 1), jnp.float32),
        grid=(nb,),
        in_specs=[
            pl.BlockSpec((batch_block * T, F), lambda i: (i, 0)),   # batch chunk i
            pl.BlockSpec((F, 4 * H), const),
            pl.BlockSpec((H, 4 * H), const),
            pl.BlockSpec((1, 4 * H), const),
            pl.BlockSpec((H, 32), const),
            pl.BlockSpec((1, 32), const),
            pl.BlockSpec((32, 1), const),
            pl.BlockSpec((1, 1), const),
        ],
        out_specs=pl.BlockSpec((batch_block, 1), lambda i: (i, 0)),
        compiler_params=pltpu.CompilerParams(
            dimension_semantics=("parallel",)),
    )(x2d, wihT, whhT, b0, w1T, bl1, woutT, bout)

    return out[:B]


def reference_forward(x, params):
    """Pure-JAX reference mirroring the PyTorch forward (runs BOTH LSTM layers)."""
    B, T, _ = x.shape
    H = params["w_hh_0"].shape[1]
    inp = x
    hn_layers = []
    for l in range(2):
        w_ih = params[f"w_ih_{l}"]
        w_hh = params[f"w_hh_{l}"]
        b = params[f"b_ih_{l}"] + params[f"b_hh_{l}"]
        h = jnp.zeros((B, H), jnp.float32)
        c = jnp.zeros((B, H), jnp.float32)
        outs = []
        for t in range(T):
            g = inp[:, t, :] @ w_ih.T + h @ w_hh.T + b
            i_g = jax.nn.sigmoid(g[:, :H])
            f_g = jax.nn.sigmoid(g[:, H:2 * H])
            g_g = jnp.tanh(g[:, 2 * H:3 * H])
            o_g = jax.nn.sigmoid(g[:, 3 * H:])
            c = f_g * c + i_g * g_g
            h = o_g * jnp.tanh(c)
            outs.append(h)
        hn_layers.append(h)
        inp = jnp.stack(outs, axis=1)
    hn0 = hn_layers[0]
    y = jnp.maximum(hn0 @ params["w_l1"].T + params["b_l1"], 0.0)
    return y @ params["w_out"].T + params["b_out"]


def make_params(key, input_size, hidden, num_layers):
    """Deterministic synthetic init (uniform(-1/sqrt(H), 1/sqrt(H)), like nn.LSTM/nn.Linear)."""
    k = 1.0 / jnp.sqrt(jnp.float32(hidden))
    params = {}
    keys = jax.random.split(key, 4 * num_layers + 4)
    ki = 0
    for l in range(num_layers):
        fin = input_size if l == 0 else hidden
        params[f"w_ih_{l}"] = jax.random.uniform(keys[ki], (4 * hidden, fin), jnp.float32, -k, k); ki += 1
        params[f"w_hh_{l}"] = jax.random.uniform(keys[ki], (4 * hidden, hidden), jnp.float32, -k, k); ki += 1
        params[f"b_ih_{l}"] = jax.random.uniform(keys[ki], (4 * hidden,), jnp.float32, -k, k); ki += 1
        params[f"b_hh_{l}"] = jax.random.uniform(keys[ki], (4 * hidden,), jnp.float32, -k, k); ki += 1
    k1 = 1.0 / jnp.sqrt(jnp.float32(hidden))
    params["w_l1"] = jax.random.uniform(keys[ki], (32, hidden), jnp.float32, -k1, k1); ki += 1
    params["b_l1"] = jax.random.uniform(keys[ki], (32,), jnp.float32, -k1, k1); ki += 1
    k2 = 1.0 / jnp.sqrt(jnp.float32(32))
    params["w_out"] = jax.random.uniform(keys[ki], (1, 32), jnp.float32, -k2, k2); ki += 1
    params["b_out"] = jax.random.uniform(keys[ki], (1,), jnp.float32, -k2, k2); ki += 1
    return params


if __name__ == "__main__":
    # architecture = {'input_layer_size': 4, 'num_rnn_layers': 2, 'num_rnn_hidden': 32}
    B, T, F, H, L = 2, 8, 4, 32, 2

    key = jax.random.PRNGKey(0)
    kx, kp = jax.random.split(key)
    x = jax.random.normal(kx, (B, T, F), jnp.float32)
    params = make_params(kp, F, H, L)

    out = timeseries_emulator_forward(x, params)
    out = jax.block_until_ready(out)

    ref = reference_forward(x, params)
    assert out.shape == (B, 1)
    assert jnp.allclose(out, ref, atol=1e-5, rtol=1e-5), (out, ref)

    print("KERNEL_OK")
</pallas_src>

<mosaic_0001>
module attributes {stable_mosaic.version = 11 : i64} {
  func.func @_emulator_kernel(%arg0: i32, %arg1: memref<64x4xf32, #tpu.memory_space<vmem>>, %arg2: memref<4x128xf32, #tpu.memory_space<vmem>>, %arg3: memref<32x128xf32, #tpu.memory_space<vmem>>, %arg4: memref<1x128xf32, #tpu.memory_space<vmem>>, %arg5: memref<32x32xf32, #tpu.memory_space<vmem>>, %arg6: memref<1x32xf32, #tpu.memory_space<vmem>>, %arg7: memref<32x1xf32, #tpu.memory_space<vmem>>, %arg8: memref<1x1xf32, #tpu.memory_space<vmem>>, %arg9: memref<8x1xf32, #tpu.memory_space<vmem>>) attributes {dimension_semantics = [#tpu.dimension_semantics<parallel>], iteration_bounds = array<i64: 1>, scalar_prefetch = 0 : i64, scratch_operands = 0 : i64, tpu.core_type = #tpu.core_type<tc>, window_params = [{transform_indices = @transform_0, window_bounds = array<i64: 64, 4>}, {pipeline_mode = #tpu.pipeline_mode<synchronous>, transform_indices = @transform_1, window_bounds = array<i64: 4, 128>}, {pipeline_mode = #tpu.pipeline_mode<synchronous>, transform_indices = @transform_2, window_bounds = array<i64: 32, 128>}, {pipeline_mode = #tpu.pipeline_mode<synchronous>, transform_indices = @transform_3, window_bounds = array<i64: 1, 128>}, {pipeline_mode = #tpu.pipeline_mode<synchronous>, transform_indices = @transform_4, window_bounds = array<i64: 32, 32>}, {pipeline_mode = #tpu.pipeline_mode<synchronous>, transform_indices = @transform_5, window_bounds = array<i64: 1, 32>}, {pipeline_mode = #tpu.pipeline_mode<synchronous>, transform_indices = @transform_6, window_bounds = array<i64: 32, 1>}, {pipeline_mode = #tpu.pipeline_mode<synchronous>, transform_indices = @transform_7, window_bounds = array<i64: 1, 1>}, {transform_indices = @transform_8, window_bounds = array<i64: 8, 1>}]} {
    %c0 = arith.constant 0 : index
    %c0_0 = arith.constant 0 : index
    %0 = vector.load %arg1[%c0, %c0_0] : memref<64x4xf32, #tpu.memory_space<vmem>>, vector<64x4xf32>
    %c0_1 = arith.constant 0 : index
    %c0_2 = arith.constant 0 : index
    %1 = vector.load %arg2[%c0_1, %c0_2] : memref<4x128xf32, #tpu.memory_space<vmem>>, vector<4x128xf32>
    %cst = arith.constant dense<0.000000e+00> : vector<64x128xf32>
    %2 = tpu.matmul %0, %1, %cst {dimension_numbers = #tpu.dot_dimension_numbers<[1], [0], [0], [1], [0, 0, 1, 1], [], []>} : vector<64x4xf32>, vector<4x128xf32>, vector<64x128xf32> -> vector<64x128xf32>
    %c0_3 = arith.constant 0 : index
    %c0_4 = arith.constant 0 : index
    %3 = vector.load %arg4[%c0_3, %c0_4] : memref<1x128xf32, #tpu.memory_space<vmem>>, vector<1x128xf32>
    %4 = vector.broadcast %3 : vector<1x128xf32> to vector<64x128xf32>
    %5 = arith.addf %2, %4 : vector<64x128xf32>
    %6 = vector.shape_cast %5 : vector<64x128xf32> to vector<8x8x128xf32>
    %c0_5 = arith.constant 0 : index
    %c0_6 = arith.constant 0 : index
    %7 = vector.load %arg3[%c0_5, %c0_6] : memref<32x128xf32, #tpu.memory_space<vmem>>, vector<32x128xf32>
    %cst_7 = arith.constant 0.000000e+00 : f32
    %8 = vector.broadcast %cst_7 : f32 to vector<8x32xf32>
    %cst_8 = arith.constant 0.000000e+00 : f32
    %9 = vector.broadcast %cst_8 : f32 to vector<8x32xf32>
    %10 = vector.extract_strided_slice %6 {offsets = [0, 0, 0], sizes = [8, 1, 128], strides = [1, 1, 1]} : vector<8x8x128xf32> to vector<8x1x128xf32>
    %11 = vector.shape_cast %10 : vector<8x1x128xf32> to vector<8x128xf32>
    %cst_9 = arith.constant dense<0.000000e+00> : vector<8x128xf32>
    %12 = tpu.matmul %8, %7, %cst_9 {dimension_numbers = #tpu.dot_dimension_numbers<[1], [0], [0], [1], [0, 0, 1, 1], [], []>} : vector<8x32xf32>, vector<32x128xf32>, vector<8x128xf32> -> vector<8x128xf32>
    %13 = arith.addf %11, %12 : vector<8x128xf32>
    %14 = arith.negf %13 : vector<8x128xf32>
    %15 = math.exp %14 : vector<8x128xf32>
    %cst_10 = arith.constant 1.000000e+00 : f32
    %16 = vector.broadcast %cst_10 : f32 to vector<8x128xf32>
    %17 = arith.addf %16, %15 : vector<8x128xf32>
    %18 = arith.divf %16, %17 : vector<8x128xf32>
    %19 = math.tanh %13 : vector<8x128xf32>
    %20 = vector.extract_strided_slice %18 {offsets = [0, 0], sizes = [8, 32], strides = [1, 1]} : vector<8x128xf32> to vector<8x32xf32>
    %21 = vector.extract_strided_slice %18 {offsets = [0, 32], sizes = [8, 32], strides = [1, 1]} : vector<8x128xf32> to vector<8x32xf32>
    %22 = vector.extract_strided_slice %19 {offsets = [0, 64], sizes = [8, 32], strides = [1, 1]} : vector<8x128xf32> to vector<8x32xf32>
    %23 = vector.extract_strided_slice %18 {offsets = [0, 96], sizes = [8, 32], strides = [1, 1]} : vector<8x128xf32> to vector<8x32xf32>
    %24 = arith.mulf %21, %9 : vector<8x32xf32>
    %25 = arith.mulf %20, %22 : vector<8x32xf32>
    %26 = arith.addf %24, %25 : vector<8x32xf32>
    %27 = math.tanh %26 : vector<8x32xf32>
    %28 = arith.mulf %23, %27 : vector<8x32xf32>
    %29 = vector.extract_strided_slice %6 {offsets = [0, 1, 0], sizes = [8, 1, 128], strides = [1, 1, 1]} : vector<8x8x128xf32> to vector<8x1x128xf32>
    %30 = vector.shape_cast %29 : vector<8x1x128xf32> to vector<8x128xf32>
    %cst_11 = arith.constant dense<0.000000e+00> : vector<8x128xf32>
    %31 = tpu.matmul %28, %7, %cst_11 {dimension_numbers = #tpu.dot_dimension_numbers<[1], [0], [0], [1], [0, 0, 1, 1], [], []>} : vector<8x32xf32>, vector<32x128xf32>, vector<8x128xf32> -> vector<8x128xf32>
    %32 = arith.addf %30, %31 : vector<8x128xf32>
    %33 = arith.negf %32 : vector<8x128xf32>
    %34 = math.exp %33 : vector<8x128xf32>
    %cst_12 = arith.constant 1.000000e+00 : f32
    %35 = vector.broadcast %cst_12 : f32 to vector<8x128xf32>
    %36 = arith.addf %35, %34 : vector<8x128xf32>
    %37 = arith.divf %35, %36 : vector<8x128xf32>
    %38 = math.tanh %32 : vector<8x128xf32>
    %39 = vector.extract_strided_slice %37 {offsets = [0, 0], sizes = [8, 32], strides = [1, 1]} : vector<8x128xf32> to vector<8x32xf32>
    %40 = vector.extract_strided_slice %37 {offsets = [0, 32], sizes = [8, 32], strides = [1, 1]} : vector<8x128xf32> to vector<8x32xf32>
    %41 = vector.extract_strided_slice %38 {offsets = [0, 64], sizes = [8, 32], strides = [1, 1]} : vector<8x128xf32> to vector<8x32xf32>
    %42 = vector.extract_strided_slice %37 {offsets = [0, 96], sizes = [8, 32], strides = [1, 1]} : vector<8x128xf32> to vector<8x32xf32>
    %43 = arith.mulf %40, %26 : vector<8x32xf32>
    %44 = arith.mulf %39, %41 : vector<8x32xf32>
    %45 = arith.addf %43, %44 : vector<8x32xf32>
    %46 = math.tanh %45 : vector<8x32xf32>
    %47 = arith.mulf %42, %46 : vector<8x32xf32>
    %48 = vector.extract_strided_slice %6 {offsets = [0, 2, 0], sizes = [8, 1, 128], strides = [1, 1, 1]} : vector<8x8x128xf32> to vector<8x1x128xf32>
    %49 = vector.shape_cast %48 : vector<8x1x128xf32> to vector<8x128xf32>
    %cst_13 = arith.constant dense<0.000000e+00> : vector<8x128xf32>
    %50 = tpu.matmul %47, %7, %cst_13 {dimension_numbers = #tpu.dot_dimension_numbers<[1], [0], [0], [1], [0, 0, 1, 1], [], []>} : vector<8x32xf32>, vector<32x128xf32>, vector<8x128xf32> -> vector<8x128xf32>
    %51 = arith.addf %49, %50 : vector<8x128xf32>
    %52 = arith.negf %51 : vector<8x128xf32>
    %53 = math.exp %52 : vector<8x128xf32>
    %cst_14 = arith.constant 1.000000e+00 : f32
    %54 = vector.broadcast %cst_14 : f32 to vector<8x128xf32>
    %55 = arith.addf %54, %53 : vector<8x128xf32>
    %56 = arith.divf %54, %55 : vector<8x128xf32>
    %57 = math.tanh %51 : vector<8x128xf32>
    %58 = vector.extract_strided_slice %56 {offsets = [0, 0], sizes = [8, 32], strides = [1, 1]} : vector<8x128xf32> to vector<8x32xf32>
    %59 = vector.extract_strided_slice %56 {offsets = [0, 32], sizes = [8, 32], strides = [1, 1]} : vector<8x128xf32> to vector<8x32xf32>
    %60 = vector.extract_strided_slice %57 {offsets = [0, 64], sizes = [8, 32], strides = [1, 1]} : vector<8x128xf32> to vector<8x32xf32>
    %61 = vector.extract_strided_slice %56 {offsets = [0, 96], sizes = [8, 32], strides = [1, 1]} : vector<8x128xf32> to vector<8x32xf32>
    %62 = arith.mulf %59, %45 : vector<8x32xf32>
    %63 = arith.mulf %58, %60 : vector<8x32xf32>
    %64 = arith.addf %62, %63 : vector<8x32xf32>
    %65 = math.tanh %64 : vector<8x32xf32>
    %66 = arith.mulf %61, %65 : vector<8x32xf32>
    %67 = vector.extract_strided_slice %6 {offsets = [0, 3, 0], sizes = [8, 1, 128], strides = [1, 1, 1]} : vector<8x8x128xf32> to vector<8x1x128xf32>
    %68 = vector.shape_cast %67 : vector<8x1x128xf32> to vector<8x128xf32>
    %cst_15 = arith.constant dense<0.000000e+00> : vector<8x128xf32>
    %69 = tpu.matmul %66, %7, %cst_15 {dimension_numbers = #tpu.dot_dimension_numbers<[1], [0], [0], [1], [0, 0, 1, 1], [], []>} : vector<8x32xf32>, vector<32x128xf32>, vector<8x128xf32> -> vector<8x128xf32>
    %70 = arith.addf %68, %69 : vector<8x128xf32>
    %71 = arith.negf %70 : vector<8x128xf32>
    %72 = math.exp %71 : vector<8x128xf32>
    %cst_16 = arith.constant 1.000000e+00 : f32
    %73 = vector.broadcast %cst_16 : f32 to vector<8x128xf32>
    %74 = arith.addf %73, %72 : vector<8x128xf32>
    %75 = arith.divf %73, %74 : vector<8x128xf32>
    %76 = math.tanh %70 : vector<8x128xf32>
    %77 = vector.extract_strided_slice %75 {offsets = [0, 0], sizes = [8, 32], strides = [1, 1]} : vector<8x128xf32> to vector<8x32xf32>
    %78 = vector.extract_strided_slice %75 {offsets = [0, 32], sizes = [8, 32], strides = [1, 1]} : vector<8x128xf32> to vector<8x32xf32>
    %79 = vector.extract_strided_slice %76 {offsets = [0, 64], sizes = [8, 32], strides = [1, 1]} : vector<8x128xf32> to vector<8x32xf32>
    %80 = vector.extract_strided_slice %75 {offsets = [0, 96], sizes = [8, 32], strides = [1, 1]} : vector<8x128xf32> to vector<8x32xf32>
    %81 = arith.mulf %78, %64 : vector<8x32xf32>
    %82 = arith.mulf %77, %79 : vector<8x32xf32>
    %83 = arith.addf %81, %82 : vector<8x32xf32>
    %84 = math.tanh %83 : vector<8x32xf32>
    %85 = arith.mulf %80, %84 : vector<8x32xf32>
    %86 = vector.extract_strided_slice %6 {offsets = [0, 4, 0], sizes = [8, 1, 128], strides = [1, 1, 1]} : vector<8x8x128xf32> to vector<8x1x128xf32>
    %87 = vector.shape_cast %86 : vector<8x1x128xf32> to vector<8x128xf32>
    %cst_17 = arith.constant dense<0.000000e+00> : vector<8x128xf32>
    %88 = tpu.matmul %85, %7, %cst_17 {dimension_numbers = #tpu.dot_dimension_numbers<[1], [0], [0], [1], [0, 0, 1, 1], [], []>} : vector<8x32xf32>, vector<32x128xf32>, vector<8x128xf32> -> vector<8x128xf32>
    %89 = arith.addf %87, %88 : vector<8x128xf32>
    %90 = arith.negf %89 : vector<8x128xf32>
    %91 = math.exp %90 : vector<8x128xf32>
    %cst_18 = arith.constant 1.000000e+00 : f32
    %92 = vector.broadcast %cst_18 : f32 to vector<8x128xf32>
    %93 = arith.addf %92, %91 : vector<8x128xf32>
    %94 = arith.divf %92, %93 : vector<8x128xf32>
    %95 = math.tanh %89 : vector<8x128xf32>
    %96 = vector.extract_strided_slice %94 {offsets = [0, 0], sizes = [8, 32], strides = [1, 1]} : vector<8x128xf32> to vector<8x32xf32>
    %97 = vector.extract_strided_slice %94 {offsets = [0, 32], sizes = [8, 32], strides = [1, 1]} : vector<8x128xf32> to vector<8x32xf32>
    %98 = vector.extract_strided_slice %95 {offsets = [0, 64], sizes = [8, 32], strides = [1, 1]} : vector<8x128xf32> to vector<8x32xf32>
    %99 = vector.extract_strided_slice %94 {offsets = [0, 96], sizes = [8, 32], strides = [1, 1]} : vector<8x128xf32> to vector<8x32xf32>
    %100 = arith.mulf %97, %83 : vector<8x32xf32>
    %101 = arith.mulf %96, %98 : vector<8x32xf32>
    %102 = arith.addf %100, %101 : vector<8x32xf32>
    %103 = math.tanh %102 : vector<8x32xf32>
    %104 = arith.mulf %99, %103 : vector<8x32xf32>
    %105 = vector.extract_strided_slice %6 {offsets = [0, 5, 0], sizes = [8, 1, 128], strides = [1, 1, 1]} : vector<8x8x128xf32> to vector<8x1x128xf32>
    %106 = vector.shape_cast %105 : vector<8x1x128xf32> to vector<8x128xf32>
    %cst_19 = arith.constant dense<0.000000e+00> : vector<8x128xf32>
    %107 = tpu.matmul %104, %7, %cst_19 {dimension_numbers = #tpu.dot_dimension_numbers<[1], [0], [0], [1], [0, 0, 1, 1], [], []>} : vector<8x32xf32>, vector<32x128xf32>, vector<8x128xf32> -> vector<8x128xf32>
    %108 = arith.addf %106, %107 : vector<8x128xf32>
    %109 = arith.negf %108 : vector<8x128xf32>
    %110 = math.exp %109 : vector<8x128xf32>
    %cst_20 = arith.constant 1.000000e+00 : f32
    %111 = vector.broadcast %cst_20 : f32 to vector<8x128xf32>
    %112 = arith.addf %111, %110 : vector<8x128xf32>
    %113 = arith.divf %111, %112 : vector<8x128xf32>
    %114 = math.tanh %108 : vector<8x128xf32>
    %115 = vector.extract_strided_slice %113 {offsets = [0, 0], sizes = [8, 32], strides = [1, 1]} : vector<8x128xf32> to vector<8x32xf32>
    %116 = vector.extract_strided_slice %113 {offsets = [0, 32], sizes = [8, 32], strides = [1, 1]} : vector<8x128xf32> to vector<8x32xf32>
    %117 = vector.extract_strided_slice %114 {offsets = [0, 64], sizes = [8, 32], strides = [1, 1]} : vector<8x128xf32> to vector<8x32xf32>
    %118 = vector.extract_strided_slice %113 {offsets = [0, 96], sizes = [8, 32], strides = [1, 1]} : vector<8x128xf32> to vector<8x32xf32>
    %119 = arith.mulf %116, %102 : vector<8x32xf32>
    %120 = arith.mulf %115, %117 : vector<8x32xf32>
    %121 = arith.addf %119, %120 : vector<8x32xf32>
    %122 = math.tanh %121 : vector<8x32xf32>
    %123 = arith.mulf %118, %122 : vector<8x32xf32>
    %124 = vector.extract_strided_slice %6 {offsets = [0, 6, 0], sizes = [8, 1, 128], strides = [1, 1, 1]} : vector<8x8x128xf32> to vector<8x1x128xf32>
    %125 = vector.shape_cast %124 : vector<8x1x128xf32> to vector<8x128xf32>
    %cst_21 = arith.constant dense<0.000000e+00> : vector<8x128xf32>
    %126 = tpu.matmul %123, %7, %cst_21 {dimension_numbers = #tpu.dot_dimension_numbers<[1], [0], [0], [1], [0, 0, 1, 1], [], []>} : vector<8x32xf32>, vector<32x128xf32>, vector<8x128xf32> -> vector<8x128xf32>
    %127 = arith.addf %125, %126 : vector<8x128xf32>
    %128 = arith.negf %127 : vector<8x128xf32>
    %129 = math.exp %128 : vector<8x128xf32>
    %cst_22 = arith.constant 1.000000e+00 : f32
    %130 = vector.broadcast %cst_22 : f32 to vector<8x128xf32>
    %131 = arith.addf %130, %129 : vector<8x128xf32>
    %132 = arith.divf %130, %131 : vector<8x128xf32>
    %133 = math.tanh %127 : vector<8x128xf32>
    %134 = vector.extract_strided_slice %132 {offsets = [0, 0], sizes = [8, 32], strides = [1, 1]} : vector<8x128xf32> to vector<8x32xf32>
    %135 = vector.extract_strided_slice %132 {offsets = [0, 32], sizes = [8, 32], strides = [1, 1]} : vector<8x128xf32> to vector<8x32xf32>
    %136 = vector.extract_strided_slice %133 {offsets = [0, 64], sizes = [8, 32], strides = [1, 1]} : vector<8x128xf32> to vector<8x32xf32>
    %137 = vector.extract_strided_slice %132 {offsets = [0, 96], sizes = [8, 32], strides = [1, 1]} : vector<8x128xf32> to vector<8x32xf32>
    %138 = arith.mulf %135, %121 : vector<8x32xf32>
    %139 = arith.mulf %134, %136 : vector<8x32xf32>
    %140 = arith.addf %138, %139 : vector<8x32xf32>
    %141 = math.tanh %140 : vector<8x32xf32>
    %142 = arith.mulf %137, %141 : vector<8x32xf32>
    %143 = vector.extract_strided_slice %6 {offsets = [0, 7, 0], sizes = [8, 1, 128], strides = [1, 1, 1]} : vector<8x8x128xf32> to vector<8x1x128xf32>
    %144 = vector.shape_cast %143 : vector<8x1x128xf32> to vector<8x128xf32>
    %cst_23 = arith.constant dense<0.000000e+00> : vector<8x128xf32>
    %145 = tpu.matmul %142, %7, %cst_23 {dimension_numbers = #tpu.dot_dimension_numbers<[1], [0], [0], [1], [0, 0, 1, 1], [], []>} : vector<8x32xf32>, vector<32x128xf32>, vector<8x128xf32> -> vector<8x128xf32>
    %146 = arith.addf %144, %145 : vector<8x128xf32>
    %147 = arith.negf %146 : vector<8x128xf32>
    %148 = math.exp %147 : vector<8x128xf32>
    %cst_24 = arith.constant 1.000000e+00 : f32
    %149 = vector.broadcast %cst_24 : f32 to vector<8x128xf32>
    %150 = arith.addf %149, %148 : vector<8x128xf32>
    %151 = arith.divf %149, %150 : vector<8x128xf32>
    %152 = math.tanh %146 : vector<8x128xf32>
    %153 = vector.extract_strided_slice %151 {offsets = [0, 0], sizes = [8, 32], strides = [1, 1]} : vector<8x128xf32> to vector<8x32xf32>
    %154 = vector.extract_strided_slice %151 {offsets = [0, 32], sizes = [8, 32], strides = [1, 1]} : vector<8x128xf32> to vector<8x32xf32>
    %155 = vector.extract_strided_slice %152 {offsets = [0, 64], sizes = [8, 32], strides = [1, 1]} : vector<8x128xf32> to vector<8x32xf32>
    %156 = vector.extract_strided_slice %151 {offsets = [0, 96], sizes = [8, 32], strides = [1, 1]} : vector<8x128xf32> to vector<8x32xf32>
    %157 = arith.mulf %154, %140 : vector<8x32xf32>
    %158 = arith.mulf %153, %155 : vector<8x32xf32>
    %159 = arith.addf %157, %158 : vector<8x32xf32>
    %160 = math.tanh %159 : vector<8x32xf32>
    %161 = arith.mulf %156, %160 : vector<8x32xf32>
    %c0_25 = arith.constant 0 : index
    %c0_26 = arith.constant 0 : index
    %162 = vector.load %arg5[%c0_25, %c0_26] : memref<32x32xf32, #tpu.memory_space<vmem>>, vector<32x32xf32>
    %cst_27 = arith.constant dense<0.000000e+00> : vector<8x32xf32>
    %163 = tpu.matmul %161, %162, %cst_27 {dimension_numbers = #tpu.dot_dimension_numbers<[1], [0], [0], [1], [0, 0, 1, 1], [], []>} : vector<8x32xf32>, vector<32x32xf32>, vector<8x32xf32> -> vector<8x32xf32>
    %c0_28 = arith.constant 0 : index
    %c0_29 = arith.constant 0 : index
    %164 = vector.load %arg6[%c0_28, %c0_29] : memref<1x32xf32, #tpu.memory_space<vmem>>, vector<1x32xf32>
    %165 = vector.broadcast %164 : vector<1x32xf32> to vector<8x32xf32>
    %166 = arith.addf %163, %165 : vector<8x32xf32>
    %cst_30 = arith.constant 0.000000e+00 : f32
    %167 = vector.broadcast %cst_30 : f32 to vector<8x32xf32>
    %168 = arith.maximumf %166, %167 : vector<8x32xf32>
    %c0_31 = arith.constant 0 : index
    %c0_32 = arith.constant 0 : index
    %169 = vector.load %arg7[%c0_31, %c0_32] : memref<32x1xf32, #tpu.memory_space<vmem>>, vector<32x1xf32>
    %cst_33 = arith.constant dense<0.000000e+00> : vector<8x1xf32>
    %170 = tpu.matmul %168, %169, %cst_33 {dimension_numbers = #tpu.dot_dimension_numbers<[1], [0], [0], [1], [0, 0, 1, 1], [], []>} : vector<8x32xf32>, vector<32x1xf32>, vector<8x1xf32> -> vector<8x1xf32>
    %c0_34 = arith.constant 0 : index
    %c0_35 = arith.constant 0 : index
    %171 = vector.load %arg8[%c0_34, %c0_35] : memref<1x1xf32, #tpu.memory_space<vmem>>, vector<1x1xf32>
    %172 = vector.broadcast %171 : vector<1x1xf32> to vector<8x1xf32>
    %173 = arith.addf %170, %172 : vector<8x1xf32>
    %c0_36 = arith.constant 0 : index
    %c0_37 = arith.constant 0 : index
    %174 = vector.load %arg9[%c0_36, %c0_37] : memref<8x1xf32, #tpu.memory_space<vmem>>, vector<8x1xf32>
    tpu.vector_store %arg9[%c0_36, %c0_37], %173 {strides = array<i32>} : memref<8x1xf32, #tpu.memory_space<vmem>>, vector<8x1xf32>,
    return
  }
  func.func @transform_0(%arg0: i32) -> (i32, i32) {
    %c0_i32 = arith.constant 0 : i32
    %c0_i32_0 = arith.constant 0 : i32
    return %arg0, %c0_i32 : i32, i32
  }
  func.func @transform_1(%arg0: i32) -> (i32, i32) {
    %c0_i32 = arith.constant 0 : i32
    %c0_i32_0 = arith.constant 0 : i32
    %c0_i32_1 = arith.constant 0 : i32
    return %c0_i32, %c0_i32_0 : i32, i32
  }
  func.func @transform_2(%arg0: i32) -> (i32, i32) {
    %c0_i32 = arith.constant 0 : i32
    %c0_i32_0 = arith.constant 0 : i32
    %c0_i32_1 = arith.constant 0 : i32
    return %c0_i32, %c0_i32_0 : i32, i32
  }
  func.func @transform_3(%arg0: i32) -> (i32, i32) {
    %c0_i32 = arith.constant 0 : i32
    %c0_i32_0 = arith.constant 0 : i32
    %c0_i32_1 = arith.constant 0 : i32
    return %c0_i32, %c0_i32_0 : i32, i32
  }
  func.func @transform_4(%arg0: i32) -> (i32, i32) {
    %c0_i32 = arith.constant 0 : i32
    %c0_i32_0 = arith.constant 0 : i32
    %c0_i32_1 = arith.constant 0 : i32
    return %c0_i32, %c0_i32_0 : i32, i32
  }
  func.func @transform_5(%arg0: i32) -> (i32, i32) {
    %c0_i32 = arith.constant 0 : i32
    %c0_i32_0 = arith.constant 0 : i32
    %c0_i32_1 = arith.constant 0 : i32
    return %c0_i32, %c0_i32_0 : i32, i32
  }
  func.func @transform_6(%arg0: i32) -> (i32, i32) {
    %c0_i32 = arith.constant 0 : i32
    %c0_i32_0 = arith.constant 0 : i32
    %c0_i32_1 = arith.constant 0 : i32
    return %c0_i32, %c0_i32_0 : i32, i32
  }
  func.func @transform_7(%arg0: i32) -> (i32, i32) {
    %c0_i32 = arith.constant 0 : i32
    %c0_i32_0 = arith.constant 0 : i32
    %c0_i32_1 = arith.constant 0 : i32
    return %c0_i32, %c0_i32_0 : i32, i32
  }
  func.func @transform_8(%arg0: i32) -> (i32, i32) {
    %c0_i32 = arith.constant 0 : i32
    %c0_i32_0 = arith.constant 0 : i32
    return %arg0, %c0_i32 : i32, i32
  }
}

</mosaic_0001>

<llo_original>
// kernel: tpu_custom_call.1
$region0: #{tpu_custom_call.1}
  #allocation0 [shape = 'u32[]', space=smem, size = 0x4, offset = 0x4, fixed_abs, tag = 'smem constant byte address 0x4 - core index']
  #allocation1 [shape = 'u32[144,128]{1,0:T(1,128)}', space=vmem, size = 0x12000, scoped, tag = 'internal scratch']
  #allocation2 [shape = 'f32[1,1]{1,0:T(1,128)S(1)}', space=vmem, size = 0x200, scoped, tag = 'scoped memory for tpu_custom_call.1']
  %s0 = inlined_call_operand.vmem [shape: f32[64,4], index: 0, kind: input, shape index: {}]
  %s1 = inlined_call_operand.vmem [shape: f32[4,128], index: 1, kind: input, shape index: {}]
  %s2 = inlined_call_operand.vmem [shape: f32[32,128], index: 2, kind: input, shape index: {}]
  %s3 = inlined_call_operand.vmem [shape: f32[1,128], index: 3, kind: input, shape index: {}]
  %s4 = inlined_call_operand.vmem [shape: f32[32,32], index: 4, kind: input, shape index: {}]
  %s5 = inlined_call_operand.vmem [shape: f32[1,32], index: 5, kind: input, shape index: {}]
  %s6 = inlined_call_operand.vmem [shape: f32[32,1], index: 6, kind: input, shape index: {}]
  %s7 = inlined_call_operand.<no memory space> [shape: f32[1,1], index: 7, kind: input, shape index: {}]
  %s8 = inlined_call_operand.vmem [shape: f32[8,1], index: 8, kind: output, shape index: {}]
  %s9 = sld [smem:[#allocation0]]
  $region42: #{tpu_custom_call.1} parent=0
    _
  %s11 = ssub.s32 1, %s9
  %s12 = scalar_select 0, %s11, %s9
  %v13 = vstv %s7
  %14 = vst [vmem:[#allocation2] sm:$0x1] %v13
  // Predicated region
  $region2: #{tpu_custom_call.1} parent=0 // pred_check
    _
  $region3: #{tpu_custom_call.1} parent=0 // pred_check_branch
    %16 = sbr.rel (0) target = $region5
  $region4: #{tpu_custom_call.1} parent=0 // pred_region
    _
  $region5: #{tpu_custom_call.1} parent=0 // pred_fallthru
    _
  // Predicated region
  $region6: #{tpu_custom_call.1} parent=0 // pred_check
    _
  $region7: #{tpu_custom_call.1} parent=0 // pred_check_branch
    %18 = sbr.rel (0) target = $region9
  $region8: #{tpu_custom_call.1} parent=0 // pred_region
    _
  $region9: #{tpu_custom_call.1} parent=0 // pred_fallthru
    _
  // Predicated region
  $region10: #{tpu_custom_call.1} parent=0 // pred_check
    _
  $region11: #{tpu_custom_call.1} parent=0 // pred_check_branch
    %20 = sbr.rel (0) target = $region13
  $region12: #{tpu_custom_call.1} parent=0 // pred_region
    _
  $region13: #{tpu_custom_call.1} parent=0 // pred_fallthru
    _
  // Predicated region
  $region14: #{tpu_custom_call.1} parent=0 // pred_check
    _
  $region15: #{tpu_custom_call.1} parent=0 // pred_check_branch
    %22 = sbr.rel (0) target = $region17
  $region16: #{tpu_custom_call.1} parent=0 // pred_region
    _
  $region17: #{tpu_custom_call.1} parent=0 // pred_fallthru
    _
  // Predicated region
  $region18: #{tpu_custom_call.1} parent=0 // pred_check
    _
  $region19: #{tpu_custom_call.1} parent=0 // pred_check_branch
    %24 = sbr.rel (0) target = $region21
  $region20: #{tpu_custom_call.1} parent=0 // pred_region
    _
  $region21: #{tpu_custom_call.1} parent=0 // pred_fallthru
    _
  // Predicated region
  $region22: #{tpu_custom_call.1} parent=0 // pred_check
    _
  $region23: #{tpu_custom_call.1} parent=0 // pred_check_branch
    %26 = sbr.rel (0) target = $region25
  $region24: #{tpu_custom_call.1} parent=0 // pred_region
    _
  $region25: #{tpu_custom_call.1} parent=0 // pred_fallthru
    _
  // Predicated region
  $region26: #{tpu_custom_call.1} parent=0 // pred_check
    _
  $region27: #{tpu_custom_call.1} parent=0 // pred_check_branch
    %28 = sbr.rel (0) target = $region29
  $region28: #{tpu_custom_call.1} parent=0 // pred_region
    _
  $region29: #{tpu_custom_call.1} parent=0 // pred_fallthru
    _
  // Predicated region
  $region30: #{tpu_custom_call.1} parent=0 // pred_check
    _
  $region31: #{tpu_custom_call.1} parent=0 // pred_check_branch
    %30 = sbr.rel (0) target = $region33
  $region32: #{tpu_custom_call.1} parent=0 // pred_region
    _
  $region33: #{tpu_custom_call.1} parent=0 // pred_fallthru
    _
  %v31 = vld [vmem:[%s0] sm:$0xff]
  %v32 = vld [vmem:[%s0 + $0x8] sm:$0xff]
  %v33 = vld [vmem:[%s0 + $0x10] sm:$0xff]
  %v34 = vld [vmem:[%s0 + $0x18] sm:$0xff]
  %v35 = vld [vmem:[%s0 + $0x20] sm:$0xff]
  %v36 = vld [vmem:[%s0 + $0x28] sm:$0xff]
  %v37 = vld [vmem:[%s0 + $0x30] sm:$0xff]
  %v38 = vld [vmem:[%s0 + $0x38] sm:$0xff]
  %v39 = vld [vmem:[%s1] sm:$0xf]
  %v40 = vld [vmem:[%s3] sm:$0x1]
  %v42 = vlaneseq
  %v43 = vshrl.u32 %v42, 7
  %v44 = vsub.s32 0, %v43
  %v45 = vrot.slane %v40, %v44
  %vm47 = vcmask 31744
  %v49 = vsel %vm47, %v31, 0
  %v52 = vsel %vm47, %v32, 0
  %v55 = vsel %vm47, %v33, 0
  %v58 = vsel %vm47, %v34, 0
  %v61 = vsel %vm47, %v35, 0
  %v64 = vsel %vm47, %v36, 0
  %v67 = vsel %vm47, %v37, 0
  %v70 = vsel %vm47, %v38, 0
  %vm72 = vcmask 1043456
  %v74 = vsel %vm72, %v39, 0
  %76 = vmatprep.subr.mxu0 0.0
  %77 = vmatpush1.msra.mxu0 %v74
  %78 = vmatprep.subr.mxu0 0.0
  %79 = vmatpush1.msra.mxu0 0.0
  %80 = vmatprep.subr.mxu0 0.0
  %81 = vmatpush1.msra.mxu0 0.0
  %82 = vmatprep.subr.mxu0 0.0
  %83 = vmatpush1.msra.mxu0 0.0
  %84 = vmatprep.subr.mxu0 0.0
  %85 = vmatpush1.msra.mxu0 0.0
  %86 = vmatprep.subr.mxu0 0.0
  %87 = vmatpush1.msra.mxu0 0.0
  %88 = vmatprep.subr.mxu0 0.0
  %89 = vmatpush1.msra.mxu0 0.0
  %90 = vmatprep.subr.mxu0 0.0
  %91 = vmatpush1.msra.mxu0 0.0
  %92 = vmatprep.subr.mxu0 0.0
  %93 = vmatpush1.msra.mxu0 0.0
  %94 = vmatprep.subr.mxu0 0.0
  %95 = vmatpush1.msra.mxu0 0.0
  %96 = vmatprep.subr.mxu0 0.0
  %97 = vmatpush1.msra.mxu0 0.0
  %98 = vmatprep.subr.mxu0 0.0
  %99 = vmatpush1.msra.mxu0 0.0
  %100 = vmatprep.subr.mxu0 0.0
  %101 = vmatpush1.msra.mxu0 0.0
  %102 = vmatprep.subr.mxu0 0.0
  %103 = vmatpush1.msra.mxu0 0.0
  %104 = vmatprep.subr.mxu0 0.0
  %105 = vmatpush1.msra.mxu0 0.0
  %106 = vmatprep.subr.mxu0 0.0
  %107 = vmatpush1.msra.mxu0 0.0
  %108 = vmatprep.subr.mxu0 0.0
  %109 = vmatpush1.msra.mxu0 0.0
  %110 = vmatprep.subr.mxu0 0.0
  %111 = vmatpush1.msra.mxu0 0.0
  %112 = vmatprep.subr.mxu0 0.0
  %113 = vmatpush1.msra.mxu0 0.0
  %114 = vmatprep.subr.mxu0 0.0
  %115 = vmatpush1.msra.mxu0 0.0
  %116 = vmatprep.subr.mxu0 0.0
  %117 = vmatpush1.msra.mxu0 0.0
  %118 = vmatprep.subr.mxu0 0.0
  %119 = vmatpush1.msra.mxu0 0.0
  %120 = vmatprep.subr.mxu0 0.0
  %121 = vmatpush1.msra.mxu0 0.0
  %122 = vmatprep.subr.mxu0 0.0
  %123 = vmatpush1.msra.mxu0 0.0
  %124 = vmatprep.subr.mxu0 0.0
  %125 = vmatpush1.msra.mxu0 0.0
  %126 = vmatprep.subr.mxu0 0.0
  %127 = vmatpush1.msra.mxu0 0.0
  %128 = vmatprep.subr.mxu0 0.0
  %129 = vmatpush1.msra.mxu0 0.0
  %130 = vmatprep.subr.mxu0 0.0
  %131 = vmatpush1.msra.mxu0 0.0
  %132 = vmatprep.subr.mxu0 0.0
  %133 = vmatpush1.msra.mxu0 0.0
  %134 = vmatprep.subr.mxu0 0.0
  %135 = vmatpush1.msra.mxu0 0.0
  %136 = vmatprep.subr.mxu0 0.0
  %137 = vmatpush1.msra.mxu0 0.0
  %138 = vmatprep.subr.mxu0 0.0
  %139 = vmatpush1.msra.mxu0 0.0
  %140 = vmatprep.mubr.f32.mxu0 0.0
  %141 = vmatmul.mubr.f32.gmra.mrb[0].mxu0 %v49
  %v142 = vpop.f32.mrb[0].mxu0
  %v143 = vadd.f32 %v45, %v142
  %v144 = vpop.f32.mrb[0].mxu0
  %145 = vmatprep.mubr.f32.mxu0 0.0
  %146 = vmatmul.mubr.f32.gmra.mrb[0].mxu0 %v52
  %v147 = vpop.f32.mrb[0].mxu0
  %v148 = vadd.f32 %v45, %v147
  %v149 = vpop.f32.mrb[0].mxu0
  %150 = vmatprep.mubr.f32.mxu0 0.0
  %151 = vmatmul.mubr.f32.gmra.mrb[0].mxu0 %v55
  %v152 = vpop.f32.mrb[0].mxu0
  %v153 = vadd.f32 %v45, %v152
  %v154 = vpop.f32.mrb[0].mxu0
  %155 = vmatprep.mubr.f32.mxu0 0.0
  %156 = vmatmul.mubr.f32.gmra.mrb[0].mxu0 %v58
  %v157 = vpop.f32.mrb[0].mxu0
  %v158 = vadd.f32 %v45, %v157
  %v159 = vpop.f32.mrb[0].mxu0
  %160 = vmatprep.mubr.f32.mxu0 0.0
  %161 = vmatmul.mubr.f32.gmra.mrb[0].mxu0 %v61
  %v162 = vpop.f32.mrb[0].mxu0
  %v163 = vadd.f32 %v45, %v162
  %v164 = vpop.f32.mrb[0].mxu0
  %165 = vmatprep.mubr.f32.mxu0 0.0
  %166 = vmatmul.mubr.f32.gmra.mrb[0].mxu0 %v64
  %v167 = vpop.f32.mrb[0].mxu0
  %v168 = vadd.f32 %v45, %v167
  %v169 = vpop.f32.mrb[0].mxu0
  %170 = vmatprep.mubr.f32.mxu0 0.0
  %171 = vmatmul.mubr.f32.gmra.mrb[0].mxu0 %v67
  %v172 = vpop.f32.mrb[0].mxu0
  %v173 = vadd.f32 %v45, %v172
  %v174 = vpop.f32.mrb[0].mxu0
  %175 = vmatprep.mubr.f32.mxu0 0.0
  %176 = vmatmul.mubr.f32.gmra.mrb[0].mxu0 %v70
  %v177 = vpop.f32.mrb[0].mxu0
  %v178 = vadd.f32 %v45, %v177
  %v179 = vpop.f32.mrb[0].mxu0
  %180 = vdwg.mxu0
  %v181 = vld [vmem:[%s2] sm:$0xff]
  %v182 = vld [vmem:[%s2 + $0x8] sm:$0xff]
  %v183 = vld [vmem:[%s2 + $0x10] sm:$0xff]
  %v184 = vld [vmem:[%s2 + $0x18] sm:$0xff]
  %vm185 = vcmask 261120
  %v187 = vsel %vm185, 0.0, 0
  %189 = vmatprep.subr.mxu0 0.0
  %190 = vmatpush1.msra.mxu0 %v181
  %191 = vmatprep.subr.mxu0 0.0
  %192 = vmatpush1.msra.mxu0 %v182
  %193 = vmatprep.subr.mxu0 0.0
  %194 = vmatpush1.msra.mxu0 %v183
  %195 = vmatprep.subr.mxu0 0.0
  %196 = vmatpush1.msra.mxu0 %v184
  %197 = vmatprep.subr.mxu0 0.0
  %198 = vmatpush1.msra.mxu0 0.0
  %199 = vmatprep.subr.mxu0 0.0
  %200 = vmatpush1.msra.mxu0 0.0
  %201 = vmatprep.subr.mxu0 0.0
  %202 = vmatpush1.msra.mxu0 0.0
  %203 = vmatprep.subr.mxu0 0.0
  %204 = vmatpush1.msra.mxu0 0.0
  %205 = vmatprep.subr.mxu0 0.0
  %206 = vmatpush1.msra.mxu0 0.0
  %207 = vmatprep.subr.mxu0 0.0
  %208 = vmatpush1.msra.mxu0 0.0
  %209 = vmatprep.subr.mxu0 0.0
  %210 = vmatpush1.msra.mxu0 0.0
  %211 = vmatprep.subr.mxu0 0.0
  %212 = vmatpush1.msra.mxu0 0.0
  %213 = vmatprep.subr.mxu0 0.0
  %214 = vmatpush1.msra.mxu0 0.0
  %215 = vmatprep.subr.mxu0 0.0
  %216 = vmatpush1.msra.mxu0 0.0
  %217 = vmatprep.subr.mxu0 0.0
  %218 = vmatpush1.msra.mxu0 0.0
  %219 = vmatprep.subr.mxu0 0.0
  %220 = vmatpush1.msra.mxu0 0.0
  %221 = vmatprep.subr.mxu0 0.0
  %222 = vmatpush1.msra.mxu0 0.0
  %223 = vmatprep.subr.mxu0 0.0
  %224 = vmatpush1.msra.mxu0 0.0
  %225 = vmatprep.subr.mxu0 0.0
  %226 = vmatpush1.msra.mxu0 0.0
  %227 = vmatprep.subr.mxu0 0.0
  %228 = vmatpush1.msra.mxu0 0.0
  %229 = vmatprep.subr.mxu0 0.0
  %230 = vmatpush1.msra.mxu0 0.0
  %231 = vmatprep.subr.mxu0 0.0
  %232 = vmatpush1.msra.mxu0 0.0
  %233 = vmatprep.subr.mxu0 0.0
  %234 = vmatpush1.msra.mxu0 0.0
  %235 = vmatprep.subr.mxu0 0.0
  %236 = vmatpush1.msra.mxu0 0.0
  %237 = vmatprep.subr.mxu0 0.0
  %238 = vmatpush1.msra.mxu0 0.0
  %239 = vmatprep.subr.mxu0 0.0
  %240 = vmatpush1.msra.mxu0 0.0
  %241 = vmatprep.subr.mxu0 0.0
  %242 = vmatpush1.msra.mxu0 0.0
  %243 = vmatprep.subr.mxu0 0.0
  %244 = vmatpush1.msra.mxu0 0.0
  %245 = vmatprep.subr.mxu0 0.0
  %246 = vmatpush1.msra.mxu0 0.0
  %247 = vmatprep.subr.mxu0 0.0
  %248 = vmatpush1.msra.mxu0 0.0
  %249 = vmatprep.subr.mxu0 0.0
  %250 = vmatpush1.msra.mxu0 0.0
  %251 = vmatprep.subr.mxu0 0.0
  %252 = vmatpush1.msra.mxu0 0.0
  %253 = vmatprep.mubr.f32.mxu0 0.0
  %254 = vmatmul.mubr.f32.gmra.mrb[0].mxu0 %v187
  %v255 = vpop.f32.mrb[0].mxu0
  %v256 = vadd.f32 0.0, %v255
  %v257 = vpop.f32.mrb[0].mxu0
  %258 = vdwg.mxu0
  %v260 = vrot.slane %v256, 1
  %v261 = vrot.slane %v256, 2
  %v262 = vrot.slane %v256, 3
  %v263 = vrot.slane %v256, 4
  %v264 = vrot.slane %v256, 5
  %v265 = vrot.slane %v256, 6
  %v266 = vrot.slane %v256, 7
  %v275 = vadd.f32 %v143, %v256
  %v276 = vadd.f32 %v148, %v260
  %v277 = vadd.f32 %v153, %v261
  %v278 = vadd.f32 %v158, %v262
  %v279 = vadd.f32 %v163, %v263
  %v280 = vadd.f32 %v168, %v264
  %v281 = vadd.f32 %v173, %v265
  %v282 = vadd.f32 %v178, %v266
  %v283 = vxor.u32 %v275, 2147483648
  %v284 = vxor.u32 %v276, 2147483648
  %v285 = vxor.u32 %v277, 2147483648
  %v286 = vxor.u32 %v278, 2147483648
  %v287 = vxor.u32 %v279, 2147483648
  %v288 = vxor.u32 %v280, 2147483648
  %v289 = vxor.u32 %v281, 2147483648
  %v290 = vxor.u32 %v282, 2147483648
  %v291 = vmul.f32 %v283, 1.442695
  %v292 = vpow.pop %v291
  %v293 = vmul.f32 %v284, 1.442695
  %v294 = vpow.pop %v293
  %v295 = vmul.f32 %v285, 1.442695
  %v296 = vpow.pop %v295
  %v297 = vmul.f32 %v286, 1.442695
  %v298 = vpow.pop %v297
  %v299 = vmul.f32 %v287, 1.442695
  %v300 = vpow.pop %v299
  %v301 = vmul.f32 %v288, 1.442695
  %v302 = vpow.pop %v301
  %v303 = vmul.f32 %v289, 1.442695
  %v304 = vpow.pop %v303
  %v305 = vmul.f32 %v290, 1.442695
  %v306 = vpow.pop %v305
  %v307 = vadd.f32 %v292, 1.0
  %v308 = vadd.f32 %v294, 1.0
  %v309 = vadd.f32 %v296, 1.0
  %v310 = vadd.f32 %v298, 1.0
  %v311 = vadd.f32 %v300, 1.0
  %v312 = vadd.f32 %v302, 1.0
  %v313 = vadd.f32 %v304, 1.0
  %v314 = vadd.f32 %v306, 1.0
  %v315 = vrcp.pop %v307
  %v316 = vmul.f32 1.0, %v315
  %v317 = vrcp.pop %v308
  %v318 = vmul.f32 1.0, %v317
  %v319 = vrcp.pop %v309
  %v320 = vmul.f32 1.0, %v319
  %v321 = vrcp.pop %v310
  %v322 = vmul.f32 1.0, %v321
  %v323 = vrcp.pop %v311
  %v324 = vmul.f32 1.0, %v323
  %v325 = vrcp.pop %v312
  %v326 = vmul.f32 1.0, %v325
  %v327 = vrcp.pop %v313
  %v328 = vmul.f32 1.0, %v327
  %v329 = vrcp.pop %v314
  %v330 = vmul.f32 1.0, %v329
  %v331 = vtanh.pop %v275
  %v332 = vtanh.pop %v276
  %v333 = vtanh.pop %v277
  %v334 = vtanh.pop %v278
  %v335 = vtanh.pop %v279
  %v336 = vtanh.pop %v280
  %v337 = vtanh.pop %v281
  %v338 = vtanh.pop %v282
  %v339 = vmul.f32 %v316, 0.0
  %v340 = vmul.f32 %v318, 0.0
  %v341 = vmul.f32 %v320, 0.0
  %v342 = vmul.f32 %v322, 0.0
  %v343 = vmul.f32 %v324, 0.0
  %v344 = vmul.f32 %v326, 0.0
  %v345 = vmul.f32 %v328, 0.0
  %v346 = vmul.f32 %v330, 0.0
  %355 = vrot.lane.b32.xlu0 %v331, 64
  %v356 = vpop.permute.xlu0 %355
  %357 = vrot.lane.b32.xlu0 %v332, 64
  %v358 = vpop.permute.xlu0 %357
  %359 = vrot.lane.b32.xlu0 %v333, 64
  %v360 = vpop.permute.xlu0 %359
  %361 = vrot.lane.b32.xlu0 %v334, 64
  %v362 = vpop.permute.xlu0 %361
  %363 = vrot.lane.b32.xlu0 %v335, 64
  %v364 = vpop.permute.xlu0 %363
  %365 = vrot.lane.b32.xlu0 %v336, 64
  %v366 = vpop.permute.xlu0 %365
  %367 = vrot.lane.b32.xlu0 %v337, 64
  %v368 = vpop.permute.xlu0 %367
  %369 = vrot.lane.b32.xlu0 %v338, 64
  %v370 = vpop.permute.xlu0 %369
  %v379 = vmul.f32 %v316, %v356
  %v380 = vmul.f32 %v318, %v358
  %v381 = vmul.f32 %v320, %v360
  %v382 = vmul.f32 %v322, %v362
  %v383 = vmul.f32 %v324, %v364
  %v384 = vmul.f32 %v326, %v366
  %v385 = vmul.f32 %v328, %v368
  %v386 = vmul.f32 %v330, %v370
  %395 = vrot.lane.b32.xlu0 %v379, 32
  %v396 = vpop.permute.xlu0 %395
  %397 = vrot.lane.b32.xlu0 %v380, 32
  %v398 = vpop.permute.xlu0 %397
  %399 = vrot.lane.b32.xlu0 %v381, 32
  %v400 = vpop.permute.xlu0 %399
  %401 = vrot.lane.b32.xlu0 %v382, 32
  %v402 = vpop.permute.xlu0 %401
  %403 = vrot.lane.b32.xlu0 %v383, 32
  %v404 = vpop.permute.xlu0 %403
  %405 = vrot.lane.b32.xlu0 %v384, 32
  %v406 = vpop.permute.xlu0 %405
  %407 = vrot.lane.b32.xlu0 %v385, 32
  %v408 = vpop.permute.xlu0 %407
  %409 = vrot.lane.b32.xlu0 %v386, 32
  %v410 = vpop.permute.xlu0 %409
  %v419 = vadd.f32 %v339, %v396
  %v420 = vadd.f32 %v340, %v398
  %v421 = vadd.f32 %v341, %v400
  %v422 = vadd.f32 %v342, %v402
  %v423 = vadd.f32 %v343, %v404
  %v424 = vadd.f32 %v344, %v406
  %v425 = vadd.f32 %v345, %v408
  %v426 = vadd.f32 %v346, %v410
  %v427 = vtanh.pop %v419
  %v428 = vtanh.pop %v420
  %v429 = vtanh.pop %v421
  %v430 = vtanh.pop %v422
  %v431 = vtanh.pop %v423
  %v432 = vtanh.pop %v424
  %v433 = vtanh.pop %v425
  %v434 = vtanh.pop %v426
  %443 = vrot.lane.b32.xlu0 %v427, 64
  %v444 = vpop.permute.xlu0 %443
  %445 = vrot.lane.b32.xlu0 %v428, 64
  %v446 = vpop.permute.xlu0 %445
  %447 = vrot.lane.b32.xlu0 %v429, 64
  %v448 = vpop.permute.xlu0 %447
  %449 = vrot.lane.b32.xlu0 %v430, 64
  %v450 = vpop.permute.xlu0 %449
  %451 = vrot.lane.b32.xlu0 %v431, 64
  %v452 = vpop.permute.xlu0 %451
  %453 = vrot.lane.b32.xlu0 %v432, 64
  %v454 = vpop.permute.xlu0 %453
  %455 = vrot.lane.b32.xlu0 %v433, 64
  %v456 = vpop.permute.xlu0 %455
  %457 = vrot.lane.b32.xlu0 %v434, 64
  %v458 = vpop.permute.xlu0 %457
  %v467 = vmul.f32 %v316, %v444
  %v468 = vmul.f32 %v318, %v446
  %v469 = vmul.f32 %v320, %v448
  %v470 = vmul.f32 %v322, %v450
  %v471 = vmul.f32 %v324, %v452
  %v472 = vmul.f32 %v326, %v454
  %v473 = vmul.f32 %v328, %v456
  %v474 = vmul.f32 %v330, %v458
  %v483 = vrot.slane %v468, 7
  %vm484 = vcmask 1041409
  %v485 = vsel %vm484, %v483, %v467
  %v486 = vrot.slane %v469, 6
  %vm487 = vcmask 1042434
  %v488 = vsel %vm487, %v486, %v485
  %v489 = vrot.slane %v470, 5
  %vm490 = vcmask 1043459
  %v491 = vsel %vm490, %v489, %v488
  %v492 = vrot.slane %v471, 4
  %vm493 = vcmask 1044484
  %v494 = vsel %vm493, %v492, %v491
  %v495 = vrot.slane %v472, 3
  %vm496 = vcmask 1045509
  %v497 = vsel %vm496, %v495, %v494
  %v498 = vrot.slane %v473, 2
  %vm499 = vcmask 1046534
  %v500 = vsel %vm499, %v498, %v497
  %v501 = vrot.slane %v474, 1
  %vm502 = vcmask 1047559
  %v503 = vsel %vm502, %v501, %v500
  %504 = vrot.lane.b32.xlu0 %v503, 32
  %v505 = vpop.permute.xlu0 %504
  %v506 = vsel %vm185, %v505, 0
  %508 = vmatprep.subr.mxu0 0.0
  %509 = vmatpush1.msra.mxu0 %v181
  %510 = vmatprep.subr.mxu0 0.0
  %511 = vmatpush1.msra.mxu0 %v182
  %512 = vmatprep.subr.mxu0 0.0
  %513 = vmatpush1.msra.mxu0 %v183
  %514 = vmatprep.subr.mxu0 0.0
  %515 = vmatpush1.msra.mxu0 %v184
  %516 = vmatprep.subr.mxu0 0.0
  %517 = vmatpush1.msra.mxu0 0.0
  %518 = vmatprep.subr.mxu0 0.0
  %519 = vmatpush1.msra.mxu0 0.0
  %520 = vmatprep.subr.mxu0 0.0
  %521 = vmatpush1.msra.mxu0 0.0
  %522 = vmatprep.subr.mxu0 0.0
  %523 = vmatpush1.msra.mxu0 0.0
  %524 = vmatprep.subr.mxu0 0.0
  %525 = vmatpush1.msra.mxu0 0.0
  %526 = vmatprep.subr.mxu0 0.0
  %527 = vmatpush1.msra.mxu0 0.0
  %528 = vmatprep.subr.mxu0 0.0
  %529 = vmatpush1.msra.mxu0 0.0
  %530 = vmatprep.subr.mxu0 0.0
  %531 = vmatpush1.msra.mxu0 0.0
  %532 = vmatprep.subr.mxu0 0.0
  %533 = vmatpush1.msra.mxu0 0.0
  %534 = vmatprep.subr.mxu0 0.0
  %535 = vmatpush1.msra.mxu0 0.0
  %536 = vmatprep.subr.mxu0 0.0
  %537 = vmatpush1.msra.mxu0 0.0
  %538 = vmatprep.subr.mxu0 0.0
  %539 = vmatpush1.msra.mxu0 0.0
  %540 = vmatprep.subr.mxu0 0.0
  %541 = vmatpush1.msra.mxu0 0.0
  %542 = vmatprep.subr.mxu0 0.0
  %543 = vmatpush1.msra.mxu0 0.0
  %544 = vmatprep.subr.mxu0 0.0
  %545 = vmatpush1.msra.mxu0 0.0
  %546 = vmatprep.subr.mxu0 0.0
  %547 = vmatpush1.msra.mxu0 0.0
  %548 = vmatprep.subr.mxu0 0.0
  %549 = vmatpush1.msra.mxu0 0.0
  %550 = vmatprep.subr.mxu0 0.0
  %551 = vmatpush1.msra.mxu0 0.0
  %552 = vmatprep.subr.mxu0 0.0
  %553 = vmatpush1.msra.mxu0 0.0
  %554 = vmatprep.subr.mxu0 0.0
  %555 = vmatpush1.msra.mxu0 0.0
  %556 = vmatprep.subr.mxu0 0.0
  %557 = vmatpush1.msra.mxu0 0.0
  %558 = vmatprep.subr.mxu0 0.0
  %559 = vmatpush1.msra.mxu0 0.0
  %560 = vmatprep.subr.mxu0 0.0
  %561 = vmatpush1.msra.mxu0 0.0
  %562 = vmatprep.subr.mxu0 0.0
  %563 = vmatpush1.msra.mxu0 0.0
  %564 = vmatprep.subr.mxu0 0.0
  %565 = vmatpush1.msra.mxu0 0.0
  %566 = vmatprep.subr.mxu0 0.0
  %567 = vmatpush1.msra.mxu0 0.0
  %568 = vmatprep.subr.mxu0 0.0
  %569 = vmatpush1.msra.mxu0 0.0
  %570 = vmatprep.subr.mxu0 0.0
  %571 = vmatpush1.msra.mxu0 0.0
  %572 = vmatprep.mubr.f32.mxu0 0.0
  %573 = vmatmul.mubr.f32.gmra.mrb[0].mxu0 %v506
  %v574 = vpop.f32.mrb[0].mxu0
  %v575 = vadd.f32 0.0, %v574
  %v576 = vpop.f32.mrb[0].mxu0
  %577 = vdwg.mxu0
  %v579 = vrot.slane %v575, 7
  %v580 = vrot.slane %v575, 1
  %v581 = vrot.slane %v575, 2
  %v582 = vrot.slane %v575, 3
  %v583 = vrot.slane %v575, 4
  %v584 = vrot.slane %v575, 5
  %v585 = vrot.slane %v575, 6
  %v594 = vadd.f32 %v143, %v579
  %v595 = vadd.f32 %v148, %v575
  %v596 = vadd.f32 %v153, %v580
  %v597 = vadd.f32 %v158, %v581
  %v598 = vadd.f32 %v163, %v582
  %v599 = vadd.f32 %v168, %v583
  %v600 = vadd.f32 %v173, %v584
  %v601 = vadd.f32 %v178, %v585
  %v602 = vxor.u32 %v594, 2147483648
  %v603 = vxor.u32 %v595, 2147483648
  %v604 = vxor.u32 %v596, 2147483648
  %v605 = vxor.u32 %v597, 2147483648
  %v606 = vxor.u32 %v598, 2147483648
  %v607 = vxor.u32 %v599, 2147483648
  %v608 = vxor.u32 %v600, 2147483648
  %v609 = vxor.u32 %v601, 2147483648
  %v610 = vmul.f32 %v602, 1.442695
  %v611 = vpow.pop %v610
  %v612 = vmul.f32 %v603, 1.442695
  %v613 = vpow.pop %v612
  %v614 = vmul.f32 %v604, 1.442695
  %v615 = vpow.pop %v614
  %v616 = vmul.f32 %v605, 1.442695
  %v617 = vpow.pop %v616
  %v618 = vmul.f32 %v606, 1.442695
  %v619 = vpow.pop %v618
  %v620 = vmul.f32 %v607, 1.442695
  %v621 = vpow.pop %v620
  %v622 = vmul.f32 %v608, 1.442695
  %v623 = vpow.pop %v622
  %v624 = vmul.f32 %v609, 1.442695
  %v625 = vpow.pop %v624
  %v626 = vadd.f32 %v611, 1.0
  %v627 = vadd.f32 %v613, 1.0
  %v628 = vadd.f32 %v615, 1.0
  %v629 = vadd.f32 %v617, 1.0
  %v630 = vadd.f32 %v619, 1.0
  %v631 = vadd.f32 %v621, 1.0
  %v632 = vadd.f32 %v623, 1.0
  %v633 = vadd.f32 %v625, 1.0
  %v634 = vrcp.pop %v626
  %v635 = vmul.f32 1.0, %v634
  %v636 = vrcp.pop %v627
  %v637 = vmul.f32 1.0, %v636
  %v638 = vrcp.pop %v628
  %v639 = vmul.f32 1.0, %v638
  %v640 = vrcp.pop %v629
  %v641 = vmul.f32 1.0, %v640
  %v642 = vrcp.pop %v630
  %v643 = vmul.f32 1.0, %v642
  %v644 = vrcp.pop %v631
  %v645 = vmul.f32 1.0, %v644
  %v646 = vrcp.pop %v632
  %v647 = vmul.f32 1.0, %v646
  %v648 = vrcp.pop %v633
  %v649 = vmul.f32 1.0, %v648
  %v650 = vtanh.pop %v594
  %v651 = vtanh.pop %v595
  %v652 = vtanh.pop %v596
  %v653 = vtanh.pop %v597
  %v654 = vtanh.pop %v598
  %v655 = vtanh.pop %v599
  %v656 = vtanh.pop %v600
  %v657 = vtanh.pop %v601
  %v666 = vrot.slane %v419, 7
  %v667 = vrot.slane %v420, 7
  %v668 = vrot.slane %v421, 7
  %v669 = vrot.slane %v422, 7
  %v670 = vrot.slane %v423, 7
  %v671 = vrot.slane %v424, 7
  %v672 = vrot.slane %v425, 7
  %v673 = vrot.slane %v426, 7
  %v682 = vmul.f32 %v635, %v666
  %v683 = vmul.f32 %v637, %v667
  %v684 = vmul.f32 %v639, %v668
  %v685 = vmul.f32 %v641, %v669
  %v686 = vmul.f32 %v643, %v670
  %v687 = vmul.f32 %v645, %v671
  %v688 = vmul.f32 %v647, %v672
  %v689 = vmul.f32 %v649, %v673
  %698 = vrot.lane.b32.xlu0 %v650, 64
  %v699 = vpop.permute.xlu0 %698
  %700 = vrot.lane.b32.xlu0 %v651, 64
  %v701 = vpop.permute.xlu0 %700
  %702 = vrot.lane.b32.xlu0 %v652, 64
  %v703 = vpop.permute.xlu0 %702
  %704 = vrot.lane.b32.xlu0 %v653, 64
  %v705 = vpop.permute.xlu0 %704
  %706 = vrot.lane.b32.xlu0 %v654, 64
  %v707 = vpop.permute.xlu0 %706
  %708 = vrot.lane.b32.xlu0 %v655, 64
  %v709 = vpop.permute.xlu0 %708
  %710 = vrot.lane.b32.xlu0 %v656, 64
  %v711 = vpop.permute.xlu0 %710
  %712 = vrot.lane.b32.xlu0 %v657, 64
  %v713 = vpop.permute.xlu0 %712
  %v722 = vmul.f32 %v635, %v699
  %v723 = vmul.f32 %v637, %v701
  %v724 = vmul.f32 %v639, %v703
  %v725 = vmul.f32 %v641, %v705
  %v726 = vmul.f32 %v643, %v707
  %v727 = vmul.f32 %v645, %v709
  %v728 = vmul.f32 %v647, %v711
  %v729 = vmul.f32 %v649, %v713
  %738 = vrot.lane.b32.xlu0 %v722, 32
  %v739 = vpop.permute.xlu0 %738
  %740 = vrot.lane.b32.xlu0 %v723, 32
  %v741 = vpop.permute.xlu0 %740
  %742 = vrot.lane.b32.xlu0 %v724, 32
  %v743 = vpop.permute.xlu0 %742
  %744 = vrot.lane.b32.xlu0 %v725, 32
  %v745 = vpop.permute.xlu0 %744
  %746 = vrot.lane.b32.xlu0 %v726, 32
  %v747 = vpop.permute.xlu0 %746
  %748 = vrot.lane.b32.xlu0 %v727, 32
  %v749 = vpop.permute.xlu0 %748
  %750 = vrot.lane.b32.xlu0 %v728, 32
  %v751 = vpop.permute.xlu0 %750
  %752 = vrot.lane.b32.xlu0 %v729, 32
  %v753 = vpop.permute.xlu0 %752
  %v762 = vadd.f32 %v682, %v739
  %v763 = vadd.f32 %v683, %v741
  %v764 = vadd.f32 %v684, %v743
  %v765 = vadd.f32 %v685, %v745
  %v766 = vadd.f32 %v686, %v747
  %v767 = vadd.f32 %v687, %v749
  %v768 = vadd.f32 %v688, %v751
  %v769 = vadd.f32 %v689, %v753
  %v770 = vtanh.pop %v762
  %v771 = vtanh.pop %v763
  %v772 = vtanh.pop %v764
  %v773 = vtanh.pop %v765
  %v774 = vtanh.pop %v766
  %v775 = vtanh.pop %v767
  %v776 = vtanh.pop %v768
  %v777 = vtanh.pop %v769
  %786 = vrot.lane.b32.xlu0 %v770, 64
  %v787 = vpop.permute.xlu0 %786
  %788 = vrot.lane.b32.xlu0 %v771, 64
  %v789 = vpop.permute.xlu0 %788
  %790 = vrot.lane.b32.xlu0 %v772, 64
  %v791 = vpop.permute.xlu0 %790
  %792 = vrot.lane.b32.xlu0 %v773, 64
  %v793 = vpop.permute.xlu0 %792
  %794 = vrot.lane.b32.xlu0 %v774, 64
  %v795 = vpop.permute.xlu0 %794
  %796 = vrot.lane.b32.xlu0 %v775, 64
  %v797 = vpop.permute.xlu0 %796
  %798 = vrot.lane.b32.xlu0 %v776, 64
  %v799 = vpop.permute.xlu0 %798
  %800 = vrot.lane.b32.xlu0 %v777, 64
  %v801 = vpop.permute.xlu0 %800
  %v810 = vmul.f32 %v635, %v787
  %v811 = vmul.f32 %v637, %v789
  %v812 = vmul.f32 %v639, %v791
  %v813 = vmul.f32 %v641, %v793
  %v814 = vmul.f32 %v643, %v795
  %v815 = vmul.f32 %v645, %v797
  %v816 = vmul.f32 %v647, %v799
  %v817 = vmul.f32 %v649, %v801
  %v826 = vrot.slane %v810, 1
  %v827 = vsel %vm484, %v811, %v826
  %v828 = vrot.slane %v812, 7
  %v829 = vsel %vm487, %v828, %v827
  %v830 = vrot.slane %v813, 6
  %v831 = vsel %vm490, %v830, %v829
  %v832 = vrot.slane %v814, 5
  %v833 = vsel %vm493, %v832, %v831
  %v834 = vrot.slane %v815, 4
  %v835 = vsel %vm496, %v834, %v833
  %v836 = vrot.slane %v816, 3
  %v837 = vsel %vm499, %v836, %v835
  %v838 = vrot.slane %v817, 2
  %v839 = vsel %vm502, %v838, %v837
  %840 = vrot.lane.b32.xlu0 %v839, 32
  %v841 = vpop.permute.xlu0 %840
  %v842 = vsel %vm185, %v841, 0
  %844 = vmatprep.subr.mxu0 0.0
  %845 = vmatpush1.msra.mxu0 %v181
  %846 = vmatprep.subr.mxu0 0.0
  %847 = vmatpush1.msra.mxu0 %v182
  %848 = vmatprep.subr.mxu0 0.0
  %849 = vmatpush1.msra.mxu0 %v183
  %850 = vmatprep.subr.mxu0 0.0
  %851 = vmatpush1.msra.mxu0 %v184
  %852 = vmatprep.subr.mxu0 0.0
  %853 = vmatpush1.msra.mxu0 0.0
  %854 = vmatprep.subr.mxu0 0.0
  %855 = vmatpush1.msra.mxu0 0.0
  %856 = vmatprep.subr.mxu0 0.0
  %857 = vmatpush1.msra.mxu0 0.0
  %858 = vmatprep.subr.mxu0 0.0
  %859 = vmatpush1.msra.mxu0 0.0
  %860 = vmatprep.subr.mxu0 0.0
  %861 = vmatpush1.msra.mxu0 0.0
  %862 = vmatprep.subr.mxu0 0.0
  %863 = vmatpush1.msra.mxu0 0.0
  %864 = vmatprep.subr.mxu0 0.0
  %865 = vmatpush1.msra.mxu0 0.0
  %866 = vmatprep.subr.mxu0 0.0
  %867 = vmatpush1.msra.mxu0 0.0
  %868 = vmatprep.subr.mxu0 0.0
  %869 = vmatpush1.msra.mxu0 0.0
  %870 = vmatprep.subr.mxu0 0.0
  %871 = vmatpush1.msra.mxu0 0.0
  %872 = vmatprep.subr.mxu0 0.0
  %873 = vmatpush1.msra.mxu0 0.0
  %874 = vmatprep.subr.mxu0 0.0
  %875 = vmatpush1.msra.mxu0 0.0
  %876 = vmatprep.subr.mxu0 0.0
  %877 = vmatpush1.msra.mxu0 0.0
  %878 = vmatprep.subr.mxu0 0.0
  %879 = vmatpush1.msra.mxu0 0.0
  %880 = vmatprep.subr.mxu0 0.0
  %881 = vmatpush1.msra.mxu0 0.0
  %882 = vmatprep.subr.mxu0 0.0
  %883 = vmatpush1.msra.mxu0 0.0
  %884 = vmatprep.subr.mxu0 0.0
  %885 = vmatpush1.msra.mxu0 0.0
  %886 = vmatprep.subr.mxu0 0.0
  %887 = vmatpush1.msra.mxu0 0.0
  %888 = vmatprep.subr.mxu0 0.0
  %889 = vmatpush1.msra.mxu0 0.0
  %890 = vmatprep.subr.mxu0 0.0
  %891 = vmatpush1.msra.mxu0 0.0
  %892 = vmatprep.subr.mxu0 0.0
  %893 = vmatpush1.msra.mxu0 0.0
  %894 = vmatprep.subr.mxu0 0.0
  %895 = vmatpush1.msra.mxu0 0.0
  %896 = vmatprep.subr.mxu0 0.0
  %897 = vmatpush1.msra.mxu0 0.0
  %898 = vmatprep.subr.mxu0 0.0
  %899 = vmatpush1.msra.mxu0 0.0
  %900 = vmatprep.subr.mxu0 0.0
  %901 = vmatpush1.msra.mxu0 0.0
  %902 = vmatprep.subr.mxu0 0.0
  %903 = vmatpush1.msra.mxu0 0.0
  %904 = vmatprep.subr.mxu0 0.0
  %905 = vmatpush1.msra.mxu0 0.0
  %906 = vmatprep.subr.mxu0 0.0
  %907 = vmatpush1.msra.mxu0 0.0
  %908 = vmatprep.mubr.f32.mxu0 0.0
  %909 = vmatmul.mubr.f32.gmra.mrb[0].mxu0 %v842
  %v910 = vpop.f32.mrb[0].mxu0
  %v911 = vadd.f32 0.0, %v910
  %v912 = vpop.f32.mrb[0].mxu0
  %913 = vdwg.mxu0
  %v915 = vrot.slane %v911, 6
  %v916 = vrot.slane %v911, 7
  %v917 = vrot.slane %v911, 1
  %v918 = vrot.slane %v911, 2
  %v919 = vrot.slane %v911, 3
  %v920 = vrot.slane %v911, 4
  %v921 = vrot.slane %v911, 5
  %v930 = vadd.f32 %v143, %v915
  %v931 = vadd.f32 %v148, %v916
  %v932 = vadd.f32 %v153, %v911
  %v933 = vadd.f32 %v158, %v917
  %v934 = vadd.f32 %v163, %v918
  %v935 = vadd.f32 %v168, %v919
  %v936 = vadd.f32 %v173, %v920
  %v937 = vadd.f32 %v178, %v921
  %v938 = vxor.u32 %v930, 2147483648
  %v939 = vxor.u32 %v931, 2147483648
  %v940 = vxor.u32 %v932, 2147483648
  %v941 = vxor.u32 %v933, 2147483648
  %v942 = vxor.u32 %v934, 2147483648
  %v943 = vxor.u32 %v935, 2147483648
  %v944 = vxor.u32 %v936, 2147483648
  %v945 = vxor.u32 %v937, 2147483648
  %v946 = vmul.f32 %v938, 1.442695
  %v947 = vpow.pop %v946
  %v948 = vmul.f32 %v939, 1.442695
  %v949 = vpow.pop %v948
  %v950 = vmul.f32 %v940, 1.442695
  %v951 = vpow.pop %v950
  %v952 = vmul.f32 %v941, 1.442695
  %v953 = vpow.pop %v952
  %v954 = vmul.f32 %v942, 1.442695
  %v955 = vpow.pop %v954
  %v956 = vmul.f32 %v943, 1.442695
  %v957 = vpow.pop %v956
  %v958 = vmul.f32 %v944, 1.442695
  %v959 = vpow.pop %v958
  %v960 = vmul.f32 %v945, 1.442695
  %v961 = vpow.pop %v960
  %v962 = vadd.f32 %v947, 1.0
  %v963 = vadd.f32 %v949, 1.0
  %v964 = vadd.f32 %v951, 1.0
  %v965 = vadd.f32 %v953, 1.0
  %v966 = vadd.f32 %v955, 1.0
  %v967 = vadd.f32 %v957, 1.0
  %v968 = vadd.f32 %v959, 1.0
  %v969 = vadd.f32 %v961, 1.0
  %v970 = vrcp.pop %v962
  %v971 = vmul.f32 1.0, %v970
  %v972 = vrcp.pop %v963
  %v973 = vmul.f32 1.0, %v972
  %v974 = vrcp.pop %v964
  %v975 = vmul.f32 1.0, %v974
  %v976 = vrcp.pop %v965
  %v977 = vmul.f32 1.0, %v976
  %v978 = vrcp.pop %v966
  %v979 = vmul.f32 1.0, %v978
  %v980 = vrcp.pop %v967
  %v981 = vmul.f32 1.0, %v980
  %v982 = vrcp.pop %v968
  %v983 = vmul.f32 1.0, %v982
  %v984 = vrcp.pop %v969
  %v985 = vmul.f32 1.0, %v984
  %v986 = vtanh.pop %v930
  %v987 = vtanh.pop %v931
  %v988 = vtanh.pop %v932
  %v989 = vtanh.pop %v933
  %v990 = vtanh.pop %v934
  %v991 = vtanh.pop %v935
  %v992 = vtanh.pop %v936
  %v993 = vtanh.pop %v937
  %v1002 = vrot.slane %v762, 7
  %v1003 = vrot.slane %v763, 7
  %v1004 = vrot.slane %v764, 7
  %v1005 = vrot.slane %v765, 7
  %v1006 = vrot.slane %v766, 7
  %v1007 = vrot.slane %v767, 7
  %v1008 = vrot.slane %v768, 7
  %v1009 = vrot.slane %v769, 7
  %v1018 = vmul.f32 %v971, %v1002
  %v1019 = vmul.f32 %v973, %v1003
  %v1020 = vmul.f32 %v975, %v1004
  %v1021 = vmul.f32 %v977, %v1005
  %v1022 = vmul.f32 %v979, %v1006
  %v1023 = vmul.f32 %v981, %v1007
  %v1024 = vmul.f32 %v983, %v1008
  %v1025 = vmul.f32 %v985, %v1009
  %1034 = vrot.lane.b32.xlu0 %v986, 64
  %v1035 = vpop.permute.xlu0 %1034
  %1036 = vrot.lane.b32.xlu0 %v987, 64
  %v1037 = vpop.permute.xlu0 %1036
  %1038 = vrot.lane.b32.xlu0 %v988, 64
  %v1039 = vpop.permute.xlu0 %1038
  %1040 = vrot.lane.b32.xlu0 %v989, 64
  %v1041 = vpop.permute.xlu0 %1040
  %1042 = vrot.lane.b32.xlu0 %v990, 64
  %v1043 = vpop.permute.xlu0 %1042
  %1044 = vrot.lane.b32.xlu0 %v991, 64
  %v1045 = vpop.permute.xlu0 %1044
  %1046 = vrot.lane.b32.xlu0 %v992, 64
  %v1047 = vpop.permute.xlu0 %1046
  %1048 = vrot.lane.b32.xlu0 %v993, 64
  %v1049 = vpop.permute.xlu0 %1048
  %v1058 = vmul.f32 %v971, %v1035
  %v1059 = vmul.f32 %v973, %v1037
  %v1060 = vmul.f32 %v975, %v1039
  %v1061 = vmul.f32 %v977, %v1041
  %v1062 = vmul.f32 %v979, %v1043
  %v1063 = vmul.f32 %v981, %v1045
  %v1064 = vmul.f32 %v983, %v1047
  %v1065 = vmul.f32 %v985, %v1049
  %1074 = vrot.lane.b32.xlu0 %v1058, 32
  %v1075 = vpop.permute.xlu0 %1074
  %1076 = vrot.lane.b32.xlu0 %v1059, 32
  %v1077 = vpop.permute.xlu0 %1076
  %1078 = vrot.lane.b32.xlu0 %v1060, 32
  %v1079 = vpop.permute.xlu0 %1078
  %1080 = vrot.lane.b32.xlu0 %v1061, 32
  %v1081 = vpop.permute.xlu0 %1080
  %1082 = vrot.lane.b32.xlu0 %v1062, 32
  %v1083 = vpop.permute.xlu0 %1082
  %1084 = vrot.lane.b32.xlu0 %v1063, 32
  %v1085 = vpop.permute.xlu0 %1084
  %1086 = vrot.lane.b32.xlu0 %v1064, 32
  %v1087 = vpop.permute.xlu0 %1086
  %1088 = vrot.lane.b32.xlu0 %v1065, 32
  %v1089 = vpop.permute.xlu0 %1088
  %v1098 = vadd.f32 %v1018, %v1075
  %v1099 = vadd.f32 %v1019, %v1077
  %v1100 = vadd.f32 %v1020, %v1079
  %v1101 = vadd.f32 %v1021, %v1081
  %v1102 = vadd.f32 %v1022, %v1083
  %v1103 = vadd.f32 %v1023, %v1085
  %v1104 = vadd.f32 %v1024, %v1087
  %v1105 = vadd.f32 %v1025, %v1089
  %v1106 = vtanh.pop %v1098
  %v1107 = vtanh.pop %v1099
  %v1108 = vtanh.pop %v1100
  %v1109 = vtanh.pop %v1101
  %v1110 = vtanh.pop %v1102
  %v1111 = vtanh.pop %v1103
  %v1112 = vtanh.pop %v1104
  %v1113 = vtanh.pop %v1105
  %1122 = vrot.lane.b32.xlu0 %v1106, 64
  %v1123 = vpop.permute.xlu0 %1122
  %1124 = vrot.lane.b32.xlu0 %v1107, 64
  %v1125 = vpop.permute.xlu0 %1124
  %1126 = vrot.lane.b32.xlu0 %v1108, 64
  %v1127 = vpop.permute.xlu0 %1126
  %1128 = vrot.lane.b32.xlu0 %v1109, 64
  %v1129 = vpop.permute.xlu0 %1128
  %1130 = vrot.lane.b32.xlu0 %v1110, 64
  %v1131 = vpop.permute.xlu0 %1130
  %1132 = vrot.lane.b32.xlu0 %v1111, 64
  %v1133 = vpop.permute.xlu0 %1132
  %1134 = vrot.lane.b32.xlu0 %v1112, 64
  %v1135 = vpop.permute.xlu0 %1134
  %1136 = vrot.lane.b32.xlu0 %v1113, 64
  %v1137 = vpop.permute.xlu0 %1136
  %v1146 = vmul.f32 %v971, %v1123
  %v1147 = vmul.f32 %v973, %v1125
  %v1148 = vmul.f32 %v975, %v1127
  %v1149 = vmul.f32 %v977, %v1129
  %v1150 = vmul.f32 %v979, %v1131
  %v1151 = vmul.f32 %v981, %v1133
  %v1152 = vmul.f32 %v983, %v1135
  %v1153 = vmul.f32 %v985, %v1137
  %v1162 = vrot.slane %v1146, 2
  %v1163 = vrot.slane %v1147, 1
  %v1164 = vsel %vm484, %v1163, %v1162
  %v1165 = vsel %vm487, %v1148, %v1164
  %v1166 = vrot.slane %v1149, 7
  %v1167 = vsel %vm490, %v1166, %v1165
  %v1168 = vrot.slane %v1150, 6
  %v1169 = vsel %vm493, %v1168, %v1167
  %v1170 = vrot.slane %v1151, 5
  %v1171 = vsel %vm496, %v1170, %v1169
  %v1172 = vrot.slane %v1152, 4
  %v1173 = vsel %vm499, %v1172, %v1171
  %v1174 = vrot.slane %v1153, 3
  %v1175 = vsel %vm502, %v1174, %v1173
  %1176 = vrot.lane.b32.xlu0 %v1175, 32
  %v1177 = vpop.permute.xlu0 %1176
  %v1178 = vsel %vm185, %v1177, 0
  %1180 = vmatprep.subr.mxu0 0.0
  %1181 = vmatpush1.msra.mxu0 %v181
  %1182 = vmatprep.subr.mxu0 0.0
  %1183 = vmatpush1.msra.mxu0 %v182
  %1184 = vmatprep.subr.mxu0 0.0
  %1185 = vmatpush1.msra.mxu0 %v183
  %1186 = vmatprep.subr.mxu0 0.0
  %1187 = vmatpush1.msra.mxu0 %v184
  %1188 = vmatprep.subr.mxu0 0.0
  %1189 = vmatpush1.msra.mxu0 0.0
  %1190 = vmatprep.subr.mxu0 0.0
  %1191 = vmatpush1.msra.mxu0 0.0
  %1192 = vmatprep.subr.mxu0 0.0
  %1193 = vmatpush1.msra.mxu0 0.0
  %1194 = vmatprep.subr.mxu0 0.0
  %1195 = vmatpush1.msra.mxu0 0.0
  %1196 = vmatprep.subr.mxu0 0.0
  %1197 = vmatpush1.msra.mxu0 0.0
  %1198 = vmatprep.subr.mxu0 0.0
  %1199 = vmatpush1.msra.mxu0 0.0
  %1200 = vmatprep.subr.mxu0 0.0
  %1201 = vmatpush1.msra.mxu0 0.0
  %1202 = vmatprep.subr.mxu0 0.0
  %1203 = vmatpush1.msra.mxu0 0.0
  %1204 = vmatprep.subr.mxu0 0.0
  %1205 = vmatpush1.msra.mxu0 0.0
  %1206 = vmatprep.subr.mxu0 0.0
  %1207 = vmatpush1.msra.mxu0 0.0
  %1208 = vmatprep.subr.mxu0 0.0
  %1209 = vmatpush1.msra.mxu0 0.0
  %1210 = vmatprep.subr.mxu0 0.0
  %1211 = vmatpush1.msra.mxu0 0.0
  %1212 = vmatprep.subr.mxu0 0.0
  %1213 = vmatpush1.msra.mxu0 0.0
  %1214 = vmatprep.subr.mxu0 0.0
  %1215 = vmatpush1.msra.mxu0 0.0
  %1216 = vmatprep.subr.mxu0 0.0
  %1217 = vmatpush1.msra.mxu0 0.0
  %1218 = vmatprep.subr.mxu0 0.0
  %1219 = vmatpush1.msra.mxu0 0.0
  %1220 = vmatprep.subr.mxu0 0.0
  %1221 = vmatpush1.msra.mxu0 0.0
  %1222 = vmatprep.subr.mxu0 0.0
  %1223 = vmatpush1.msra.mxu0 0.0
  %1224 = vmatprep.subr.mxu0 0.0
  %1225 = vmatpush1.msra.mxu0 0.0
  %1226 = vmatprep.subr.mxu0 0.0
  %1227 = vmatpush1.msra.mxu0 0.0
  %1228 = vmatprep.subr.mxu0 0.0
  %1229 = vmatpush1.msra.mxu0 0.0
  %1230 = vmatprep.subr.mxu0 0.0
  %1231 = vmatpush1.msra.mxu0 0.0
  %1232 = vmatprep.subr.mxu0 0.0
  %1233 = vmatpush1.msra.mxu0 0.0
  %1234 = vmatprep.subr.mxu0 0.0
  %1235 = vmatpush1.msra.mxu0 0.0
  %1236 = vmatprep.subr.mxu0 0.0
  %1237 = vmatpush1.msra.mxu0 0.0
  %1238 = vmatprep.subr.mxu0 0.0
  %1239 = vmatpush1.msra.mxu0 0.0
  %1240 = vmatprep.subr.mxu0 0.0
  %1241 = vmatpush1.msra.mxu0 0.0
  %1242 = vmatprep.subr.mxu0 0.0
  %1243 = vmatpush1.msra.mxu0 0.0
  %1244 = vmatprep.mubr.f32.mxu0 0.0
  %1245 = vmatmul.mubr.f32.gmra.mrb[0].mxu0 %v1178
  %v1246 = vpop.f32.mrb[0].mxu0
  %v1247 = vadd.f32 0.0, %v1246
  %v1248 = vpop.f32.mrb[0].mxu0
  %1249 = vdwg.mxu0
  %v1251 = vrot.slane %v1247, 5
  %v1252 = vrot.slane %v1247, 6
  %v1253 = vrot.slane %v1247, 7
  %v1254 = vrot.slane %v1247, 1
  %v1255 = vrot.slane %v1247, 2
  %v1256 = vrot.slane %v1247, 3
  %v1257 = vrot.slane %v1247, 4
  %v1266 = vadd.f32 %v143, %v1251
  %v1267 = vadd.f32 %v148, %v1252
  %v1268 = vadd.f32 %v153, %v1253
  %v1269 = vadd.f32 %v158, %v1247
  %v1270 = vadd.f32 %v163, %v1254
  %v1271 = vadd.f32 %v168, %v1255
  %v1272 = vadd.f32 %v173, %v1256
  %v1273 = vadd.f32 %v178, %v1257
  %v1274 = vxor.u32 %v1266, 2147483648
  %v1275 = vxor.u32 %v1267, 2147483648
  %v1276 = vxor.u32 %v1268, 2147483648
  %v1277 = vxor.u32 %v1269, 2147483648
  %v1278 = vxor.u32 %v1270, 2147483648
  %v1279 = vxor.u32 %v1271, 2147483648
  %v1280 = vxor.u32 %v1272, 2147483648
  %v1281 = vxor.u32 %v1273, 2147483648
  %v1282 = vmul.f32 %v1274, 1.442695
  %v1283 = vpow.pop %v1282
  %v1284 = vmul.f32 %v1275, 1.442695
  %v1285 = vpow.pop %v1284
  %v1286 = vmul.f32 %v1276, 1.442695
  %v1287 = vpow.pop %v1286
  %v1288 = vmul.f32 %v1277, 1.442695
  %v1289 = vpow.pop %v1288
  %v1290 = vmul.f32 %v1278, 1.442695
  %v1291 = vpow.pop %v1290
  %v1292 = vmul.f32 %v1279, 1.442695
  %v1293 = vpow.pop %v1292
  %v1294 = vmul.f32 %v1280, 1.442695
  %v1295 = vpow.pop %v1294
  %v1296 = vmul.f32 %v1281, 1.442695
  %v1297 = vpow.pop %v1296
  %v1298 = vadd.f32 %v1283, 1.0
  %v1299 = vadd.f32 %v1285, 1.0
  %v1300 = vadd.f32 %v1287, 1.0
  %v1301 = vadd.f32 %v1289, 1.0
  %v1302 = vadd.f32 %v1291, 1.0
  %v1303 = vadd.f32 %v1293, 1.0
  %v1304 = vadd.f32 %v1295, 1.0
  %v1305 = vadd.f32 %v1297, 1.0
  %v1306 = vrcp.pop %v1298
  %v1307 = vmul.f32 1.0, %v1306
  %v1308 = vrcp.pop %v1299
  %v1309 = vmul.f32 1.0, %v1308
  %v1310 = vrcp.pop %v1300
  %v1311 = vmul.f32 1.0, %v1310
  %v1312 = vrcp.pop %v1301
  %v1313 = vmul.f32 1.0, %v1312
  %v1314 = vrcp.pop %v1302
  %v1315 = vmul.f32 1.0, %v1314
  %v1316 = vrcp.pop %v1303
  %v1317 = vmul.f32 1.0, %v1316
  %v1318 = vrcp.pop %v1304
  %v1319 = vmul.f32 1.0, %v1318
  %v1320 = vrcp.pop %v1305
  %v1321 = vmul.f32 1.0, %v1320
  %v1322 = vtanh.pop %v1266
  %v1323 = vtanh.pop %v1267
  %v1324 = vtanh.pop %v1268
  %v1325 = vtanh.pop %v1269
  %v1326 = vtanh.pop %v1270
  %v1327 = vtanh.pop %v1271
  %v1328 = vtanh.pop %v1272
  %v1329 = vtanh.pop %v1273
  %v1338 = vrot.slane %v1098, 7
  %v1339 = vrot.slane %v1099, 7
  %v1340 = vrot.slane %v1100, 7
  %v1341 = vrot.slane %v1101, 7
  %v1342 = vrot.slane %v1102, 7
  %v1343 = vrot.slane %v1103, 7
  %v1344 = vrot.slane %v1104, 7
  %v1345 = vrot.slane %v1105, 7
  %v1354 = vmul.f32 %v1307, %v1338
  %v1355 = vmul.f32 %v1309, %v1339
  %v1356 = vmul.f32 %v1311, %v1340
  %v1357 = vmul.f32 %v1313, %v1341
  %v1358 = vmul.f32 %v1315, %v1342
  %v1359 = vmul.f32 %v1317, %v1343
  %v1360 = vmul.f32 %v1319, %v1344
  %v1361 = vmul.f32 %v1321, %v1345
  %1370 = vrot.lane.b32.xlu0 %v1322, 64
  %v1371 = vpop.permute.xlu0 %1370
  %1372 = vrot.lane.b32.xlu0 %v1323, 64
  %v1373 = vpop.permute.xlu0 %1372
  %1374 = vrot.lane.b32.xlu0 %v1324, 64
  %v1375 = vpop.permute.xlu0 %1374
  %1376 = vrot.lane.b32.xlu0 %v1325, 64
  %v1377 = vpop.permute.xlu0 %1376
  %1378 = vrot.lane.b32.xlu0 %v1326, 64
  %v1379 = vpop.permute.xlu0 %1378
  %1380 = vrot.lane.b32.xlu0 %v1327, 64
  %v1381 = vpop.permute.xlu0 %1380
  %1382 = vrot.lane.b32.xlu0 %v1328, 64
  %v1383 = vpop.permute.xlu0 %1382
  %1384 = vrot.lane.b32.xlu0 %v1329, 64
  %v1385 = vpop.permute.xlu0 %1384
  %v1394 = vmul.f32 %v1307, %v1371
  %v1395 = vmul.f32 %v1309, %v1373
  %v1396 = vmul.f32 %v1311, %v1375
  %v1397 = vmul.f32 %v1313, %v1377
  %v1398 = vmul.f32 %v1315, %v1379
  %v1399 = vmul.f32 %v1317, %v1381
  %v1400 = vmul.f32 %v1319, %v1383
  %v1401 = vmul.f32 %v1321, %v1385
  %1410 = vrot.lane.b32.xlu0 %v1394, 32
  %v1411 = vpop.permute.xlu0 %1410
  %1412 = vrot.lane.b32.xlu0 %v1395, 32
  %v1413 = vpop.permute.xlu0 %1412
  %1414 = vrot.lane.b32.xlu0 %v1396, 32
  %v1415 = vpop.permute.xlu0 %1414
  %1416 = vrot.lane.b32.xlu0 %v1397, 32
  %v1417 = vpop.permute.xlu0 %1416
  %1418 = vrot.lane.b32.xlu0 %v1398, 32
  %v1419 = vpop.permute.xlu0 %1418
  %1420 = vrot.lane.b32.xlu0 %v1399, 32
  %v1421 = vpop.permute.xlu0 %1420
  %1422 = vrot.lane.b32.xlu0 %v1400, 32
  %v1423 = vpop.permute.xlu0 %1422
  %1424 = vrot.lane.b32.xlu0 %v1401, 32
  %v1425 = vpop.permute.xlu0 %1424
  %v1434 = vadd.f32 %v1354, %v1411
  %v1435 = vadd.f32 %v1355, %v1413
  %v1436 = vadd.f32 %v1356, %v1415
  %v1437 = vadd.f32 %v1357, %v1417
  %v1438 = vadd.f32 %v1358, %v1419
  %v1439 = vadd.f32 %v1359, %v1421
  %v1440 = vadd.f32 %v1360, %v1423
  %v1441 = vadd.f32 %v1361, %v1425
  %v1442 = vtanh.pop %v1434
  %v1443 = vtanh.pop %v1435
  %v1444 = vtanh.pop %v1436
  %v1445 = vtanh.pop %v1437
  %v1446 = vtanh.pop %v1438
  %v1447 = vtanh.pop %v1439
  %v1448 = vtanh.pop %v1440
  %v1449 = vtanh.pop %v1441
  %1458 = vrot.lane.b32.xlu0 %v1442, 64
  %v1459 = vpop.permute.xlu0 %1458
  %1460 = vrot.lane.b32.xlu0 %v1443, 64
  %v1461 = vpop.permute.xlu0 %1460
  %1462 = vrot.lane.b32.xlu0 %v1444, 64
  %v1463 = vpop.permute.xlu0 %1462
  %1464 = vrot.lane.b32.xlu0 %v1445, 64
  %v1465 = vpop.permute.xlu0 %1464
  %1466 = vrot.lane.b32.xlu0 %v1446, 64
  %v1467 = vpop.permute.xlu0 %1466
  %1468 = vrot.lane.b32.xlu0 %v1447, 64
  %v1469 = vpop.permute.xlu0 %1468
  %1470 = vrot.lane.b32.xlu0 %v1448, 64
  %v1471 = vpop.permute.xlu0 %1470
  %1472 = vrot.lane.b32.xlu0 %v1449, 64
  %v1473 = vpop.permute.xlu0 %1472
  %v1482 = vmul.f32 %v1307, %v1459
  %v1483 = vmul.f32 %v1309, %v1461
  %v1484 = vmul.f32 %v1311, %v1463
  %v1485 = vmul.f32 %v1313, %v1465
  %v1486 = vmul.f32 %v1315, %v1467
  %v1487 = vmul.f32 %v1317, %v1469
  %v1488 = vmul.f32 %v1319, %v1471
  %v1489 = vmul.f32 %v1321, %v1473
  %v1498 = vrot.slane %v1482, 3
  %v1499 = vrot.slane %v1483, 2
  %v1500 = vsel %vm484, %v1499, %v1498
  %v1501 = vrot.slane %v1484, 1
  %v1502 = vsel %vm487, %v1501, %v1500
  %v1503 = vsel %vm490, %v1485, %v1502
  %v1504 = vrot.slane %v1486, 7
  %v1505 = vsel %vm493, %v1504, %v1503
  %v1506 = vrot.slane %v1487, 6
  %v1507 = vsel %vm496, %v1506, %v1505
  %v1508 = vrot.slane %v1488, 5
  %v1509 = vsel %vm499, %v1508, %v1507
  %v1510 = vrot.slane %v1489, 4
  %v1511 = vsel %vm502, %v1510, %v1509
  %1512 = vrot.lane.b32.xlu0 %v1511, 32
  %v1513 = vpop.permute.xlu0 %1512
  %v1514 = vsel %vm185, %v1513, 0
  %1516 = vmatprep.subr.mxu0 0.0
  %1517 = vmatpush1.msra.mxu0 %v181
  %1518 = vmatprep.subr.mxu0 0.0
  %1519 = vmatpush1.msra.mxu0 %v182
  %1520 = vmatprep.subr.mxu0 0.0
  %1521 = vmatpush1.msra.mxu0 %v183
  %1522 = vmatprep.subr.mxu0 0.0
  %1523 = vmatpush1.msra.mxu0 %v184
  %1524 = vmatprep.subr.mxu0 0.0
  %1525 = vmatpush1.msra.mxu0 0.0
  %1526 = vmatprep.subr.mxu0 0.0
  %1527 = vmatpush1.msra.mxu0 0.0
  %1528 = vmatprep.subr.mxu0 0.0
  %1529 = vmatpush1.msra.mxu0 0.0
  %1530 = vmatprep.subr.mxu0 0.0
  %1531 = vmatpush1.msra.mxu0 0.0
  %1532 = vmatprep.subr.mxu0 0.0
  %1533 = vmatpush1.msra.mxu0 0.0
  %1534 = vmatprep.subr.mxu0 0.0
  %1535 = vmatpush1.msra.mxu0 0.0
  %1536 = vmatprep.subr.mxu0 0.0
  %1537 = vmatpush1.msra.mxu0 0.0
  %1538 = vmatprep.subr.mxu0 0.0
  %1539 = vmatpush1.msra.mxu0 0.0
  %1540 = vmatprep.subr.mxu0 0.0
  %1541 = vmatpush1.msra.mxu0 0.0
  %1542 = vmatprep.subr.mxu0 0.0
  %1543 = vmatpush1.msra.mxu0 0.0
  %1544 = vmatprep.subr.mxu0 0.0
  %1545 = vmatpush1.msra.mxu0 0.0
  %1546 = vmatprep.subr.mxu0 0.0
  %1547 = vmatpush1.msra.mxu0 0.0
  %1548 = vmatprep.subr.mxu0 0.0
  %1549 = vmatpush1.msra.mxu0 0.0
  %1550 = vmatprep.subr.mxu0 0.0
  %1551 = vmatpush1.msra.mxu0 0.0
  %1552 = vmatprep.subr.mxu0 0.0
  %1553 = vmatpush1.msra.mxu0 0.0
  %1554 = vmatprep.subr.mxu0 0.0
  %1555 = vmatpush1.msra.mxu0 0.0
  %1556 = vmatprep.subr.mxu0 0.0
  %1557 = vmatpush1.msra.mxu0 0.0
  %1558 = vmatprep.subr.mxu0 0.0
  %1559 = vmatpush1.msra.mxu0 0.0
  %1560 = vmatprep.subr.mxu0 0.0
  %1561 = vmatpush1.msra.mxu0 0.0
  %1562 = vmatprep.subr.mxu0 0.0
  %1563 = vmatpush1.msra.mxu0 0.0
  %1564 = vmatprep.subr.mxu0 0.0
  %1565 = vmatpush1.msra.mxu0 0.0
  %1566 = vmatprep.subr.mxu0 0.0
  %1567 = vmatpush1.msra.mxu0 0.0
  %1568 = vmatprep.subr.mxu0 0.0
  %1569 = vmatpush1.msra.mxu0 0.0
  %1570 = vmatprep.subr.mxu0 0.0
  %1571 = vmatpush1.msra.mxu0 0.0
  %1572 = vmatprep.subr.mxu0 0.0
  %1573 = vmatpush1.msra.mxu0 0.0
  %1574 = vmatprep.subr.mxu0 0.0
  %1575 = vmatpush1.msra.mxu0 0.0
  %1576 = vmatprep.subr.mxu0 0.0
  %1577 = vmatpush1.msra.mxu0 0.0
  %1578 = vmatprep.subr.mxu0 0.0
  %1579 = vmatpush1.msra.mxu0 0.0
  %1580 = vmatprep.mubr.f32.mxu0 0.0
  %1581 = vmatmul.mubr.f32.gmra.mrb[0].mxu0 %v1514
  %v1582 = vpop.f32.mrb[0].mxu0
  %v1583 = vadd.f32 0.0, %v1582
  %v1584 = vpop.f32.mrb[0].mxu0
  %1585 = vdwg.mxu0
  %v1587 = vrot.slane %v1583, 4
  %v1588 = vrot.slane %v1583, 5
  %v1589 = vrot.slane %v1583, 6
  %v1590 = vrot.slane %v1583, 7
  %v1591 = vrot.slane %v1583, 1
  %v1592 = vrot.slane %v1583, 2
  %v1593 = vrot.slane %v1583, 3
  %v1602 = vadd.f32 %v143, %v1587
  %v1603 = vadd.f32 %v148, %v1588
  %v1604 = vadd.f32 %v153, %v1589
  %v1605 = vadd.f32 %v158, %v1590
  %v1606 = vadd.f32 %v163, %v1583
  %v1607 = vadd.f32 %v168, %v1591
  %v1608 = vadd.f32 %v173, %v1592
  %v1609 = vadd.f32 %v178, %v1593
  %v1610 = vxor.u32 %v1602, 2147483648
  %v1611 = vxor.u32 %v1603, 2147483648
  %v1612 = vxor.u32 %v1604, 2147483648
  %v1613 = vxor.u32 %v1605, 2147483648
  %v1614 = vxor.u32 %v1606, 2147483648
  %v1615 = vxor.u32 %v1607, 2147483648
  %v1616 = vxor.u32 %v1608, 2147483648
  %v1617 = vxor.u32 %v1609, 2147483648
  %v1618 = vmul.f32 %v1610, 1.442695
  %v1619 = vpow.pop %v1618
  %v1620 = vmul.f32 %v1611, 1.442695
  %v1621 = vpow.pop %v1620
  %v1622 = vmul.f32 %v1612, 1.442695
  %v1623 = vpow.pop %v1622
  %v1624 = vmul.f32 %v1613, 1.442695
  %v1625 = vpow.pop %v1624
  %v1626 = vmul.f32 %v1614, 1.442695
  %v1627 = vpow.pop %v1626
  %v1628 = vmul.f32 %v1615, 1.442695
  %v1629 = vpow.pop %v1628
  %v1630 = vmul.f32 %v1616, 1.442695
  %v1631 = vpow.pop %v1630
  %v1632 = vmul.f32 %v1617, 1.442695
  %v1633 = vpow.pop %v1632
  %v1634 = vadd.f32 %v1619, 1.0
  %v1635 = vadd.f32 %v1621, 1.0
  %v1636 = vadd.f32 %v1623, 1.0
  %v1637 = vadd.f32 %v1625, 1.0
  %v1638 = vadd.f32 %v1627, 1.0
  %v1639 = vadd.f32 %v1629, 1.0
  %v1640 = vadd.f32 %v1631, 1.0
  %v1641 = vadd.f32 %v1633, 1.0
  %v1642 = vrcp.pop %v1634
  %v1643 = vmul.f32 1.0, %v1642
  %v1644 = vrcp.pop %v1635
  %v1645 = vmul.f32 1.0, %v1644
  %v1646 = vrcp.pop %v1636
  %v1647 = vmul.f32 1.0, %v1646
  %v1648 = vrcp.pop %v1637
  %v1649 = vmul.f32 1.0, %v1648
  %v1650 = vrcp.pop %v1638
  %v1651 = vmul.f32 1.0, %v1650
  %v1652 = vrcp.pop %v1639
  %v1653 = vmul.f32 1.0, %v1652
  %v1654 = vrcp.pop %v1640
  %v1655 = vmul.f32 1.0, %v1654
  %v1656 = vrcp.pop %v1641
  %v1657 = vmul.f32 1.0, %v1656
  %v1658 = vtanh.pop %v1602
  %v1659 = vtanh.pop %v1603
  %v1660 = vtanh.pop %v1604
  %v1661 = vtanh.pop %v1605
  %v1662 = vtanh.pop %v1606
  %v1663 = vtanh.pop %v1607
  %v1664 = vtanh.pop %v1608
  %v1665 = vtanh.pop %v1609
  %v1674 = vrot.slane %v1434, 7
  %v1675 = vrot.slane %v1435, 7
  %v1676 = vrot.slane %v1436, 7
  %v1677 = vrot.slane %v1437, 7
  %v1678 = vrot.slane %v1438, 7
  %v1679 = vrot.slane %v1439, 7
  %v1680 = vrot.slane %v1440, 7
  %v1681 = vrot.slane %v1441, 7
  %v1690 = vmul.f32 %v1643, %v1674
  %v1691 = vmul.f32 %v1645, %v1675
  %v1692 = vmul.f32 %v1647, %v1676
  %v1693 = vmul.f32 %v1649, %v1677
  %v1694 = vmul.f32 %v1651, %v1678
  %v1695 = vmul.f32 %v1653, %v1679
  %v1696 = vmul.f32 %v1655, %v1680
  %v1697 = vmul.f32 %v1657, %v1681
  %1706 = vrot.lane.b32.xlu0 %v1658, 64
  %v1707 = vpop.permute.xlu0 %1706
  %1708 = vrot.lane.b32.xlu0 %v1659, 64
  %v1709 = vpop.permute.xlu0 %1708
  %1710 = vrot.lane.b32.xlu0 %v1660, 64
  %v1711 = vpop.permute.xlu0 %1710
  %1712 = vrot.lane.b32.xlu0 %v1661, 64
  %v1713 = vpop.permute.xlu0 %1712
  %1714 = vrot.lane.b32.xlu0 %v1662, 64
  %v1715 = vpop.permute.xlu0 %1714
  %1716 = vrot.lane.b32.xlu0 %v1663, 64
  %v1717 = vpop.permute.xlu0 %1716
  %1718 = vrot.lane.b32.xlu0 %v1664, 64
  %v1719 = vpop.permute.xlu0 %1718
  %1720 = vrot.lane.b32.xlu0 %v1665, 64
  %v1721 = vpop.permute.xlu0 %1720
  %v1730 = vmul.f32 %v1643, %v1707
  %v1731 = vmul.f32 %v1645, %v1709
  %v1732 = vmul.f32 %v1647, %v1711
  %v1733 = vmul.f32 %v1649, %v1713
  %v1734 = vmul.f32 %v1651, %v1715
  %v1735 = vmul.f32 %v1653, %v1717
  %v1736 = vmul.f32 %v1655, %v1719
  %v1737 = vmul.f32 %v1657, %v1721
  %1746 = vrot.lane.b32.xlu0 %v1730, 32
  %v1747 = vpop.permute.xlu0 %1746
  %1748 = vrot.lane.b32.xlu0 %v1731, 32
  %v1749 = vpop.permute.xlu0 %1748
  %1750 = vrot.lane.b32.xlu0 %v1732, 32
  %v1751 = vpop.permute.xlu0 %1750
  %1752 = vrot.lane.b32.xlu0 %v1733, 32
  %v1753 = vpop.permute.xlu0 %1752
  %1754 = vrot.lane.b32.xlu0 %v1734, 32
  %v1755 = vpop.permute.xlu0 %1754
  %1756 = vrot.lane.b32.xlu0 %v1735, 32
  %v1757 = vpop.permute.xlu0 %1756
  %1758 = vrot.lane.b32.xlu0 %v1736, 32
  %v1759 = vpop.permute.xlu0 %1758
  %1760 = vrot.lane.b32.xlu0 %v1737, 32
  %v1761 = vpop.permute.xlu0 %1760
  %v1770 = vadd.f32 %v1690, %v1747
  %v1771 = vadd.f32 %v1691, %v1749
  %v1772 = vadd.f32 %v1692, %v1751
  %v1773 = vadd.f32 %v1693, %v1753
  %v1774 = vadd.f32 %v1694, %v1755
  %v1775 = vadd.f32 %v1695, %v1757
  %v1776 = vadd.f32 %v1696, %v1759
  %v1777 = vadd.f32 %v1697, %v1761
  %v1778 = vtanh.pop %v1770
  %v1779 = vtanh.pop %v1771
  %v1780 = vtanh.pop %v1772
  %v1781 = vtanh.pop %v1773
  %v1782 = vtanh.pop %v1774
  %v1783 = vtanh.pop %v1775
  %v1784 = vtanh.pop %v1776
  %v1785 = vtanh.pop %v1777
  %1794 = vrot.lane.b32.xlu0 %v1778, 64
  %v1795 = vpop.permute.xlu0 %1794
  %1796 = vrot.lane.b32.xlu0 %v1779, 64
  %v1797 = vpop.permute.xlu0 %1796
  %1798 = vrot.lane.b32.xlu0 %v1780, 64
  %v1799 = vpop.permute.xlu0 %1798
  %1800 = vrot.lane.b32.xlu0 %v1781, 64
  %v1801 = vpop.permute.xlu0 %1800
  %1802 = vrot.lane.b32.xlu0 %v1782, 64
  %v1803 = vpop.permute.xlu0 %1802
  %1804 = vrot.lane.b32.xlu0 %v1783, 64
  %v1805 = vpop.permute.xlu0 %1804
  %1806 = vrot.lane.b32.xlu0 %v1784, 64
  %v1807 = vpop.permute.xlu0 %1806
  %1808 = vrot.lane.b32.xlu0 %v1785, 64
  %v1809 = vpop.permute.xlu0 %1808
  %v1818 = vmul.f32 %v1643, %v1795
  %v1819 = vmul.f32 %v1645, %v1797
  %v1820 = vmul.f32 %v1647, %v1799
  %v1821 = vmul.f32 %v1649, %v1801
  %v1822 = vmul.f32 %v1651, %v1803
  %v1823 = vmul.f32 %v1653, %v1805
  %v1824 = vmul.f32 %v1655, %v1807
  %v1825 = vmul.f32 %v1657, %v1809
  %v1834 = vrot.slane %v1818, 4
  %v1835 = vrot.slane %v1819, 3
  %v1836 = vsel %vm484, %v1835, %v1834
  %v1837 = vrot.slane %v1820, 2
  %v1838 = vsel %vm487, %v1837, %v1836
  %v1839 = vrot.slane %v1821, 1
  %v1840 = vsel %vm490, %v1839, %v1838
  %v1841 = vsel %vm493, %v1822, %v1840
  %v1842 = vrot.slane %v1823, 7
  %v1843 = vsel %vm496, %v1842, %v1841
  %v1844 = vrot.slane %v1824, 6
  %v1845 = vsel %vm499, %v1844, %v1843
  %v1846 = vrot.slane %v1825, 5
  %v1847 = vsel %vm502, %v1846, %v1845
  %1848 = vrot.lane.b32.xlu0 %v1847, 32
  %v1849 = vpop.permute.xlu0 %1848
  %v1850 = vsel %vm185, %v1849, 0
  %1852 = vmatprep.subr.mxu0 0.0
  %1853 = vmatpush1.msra.mxu0 %v181
  %1854 = vmatprep.subr.mxu0 0.0
  %1855 = vmatpush1.msra.mxu0 %v182
  %1856 = vmatprep.subr.mxu0 0.0
  %1857 = vmatpush1.msra.mxu0 %v183
  %1858 = vmatprep.subr.mxu0 0.0
  %1859 = vmatpush1.msra.mxu0 %v184
  %1860 = vmatprep.subr.mxu0 0.0
  %1861 = vmatpush1.msra.mxu0 0.0
  %1862 = vmatprep.subr.mxu0 0.0
  %1863 = vmatpush1.msra.mxu0 0.0
  %1864 = vmatprep.subr.mxu0 0.0
  %1865 = vmatpush1.msra.mxu0 0.0
  %1866 = vmatprep.subr.mxu0 0.0
  %1867 = vmatpush1.msra.mxu0 0.0
  %1868 = vmatprep.subr.mxu0 0.0
  %1869 = vmatpush1.msra.mxu0 0.0
  %1870 = vmatprep.subr.mxu0 0.0
  %1871 = vmatpush1.msra.mxu0 0.0
  %1872 = vmatprep.subr.mxu0 0.0
  %1873 = vmatpush1.msra.mxu0 0.0
  %1874 = vmatprep.subr.mxu0 0.0
  %1875 = vmatpush1.msra.mxu0 0.0
  %1876 = vmatprep.subr.mxu0 0.0
  %1877 = vmatpush1.msra.mxu0 0.0
  %1878 = vmatprep.subr.mxu0 0.0
  %1879 = vmatpush1.msra.mxu0 0.0
  %1880 = vmatprep.subr.mxu0 0.0
  %1881 = vmatpush1.msra.mxu0 0.0
  %1882 = vmatprep.subr.mxu0 0.0
  %1883 = vmatpush1.msra.mxu0 0.0
  %1884 = vmatprep.subr.mxu0 0.0
  %1885 = vmatpush1.msra.mxu0 0.0
  %1886 = vmatprep.subr.mxu0 0.0
  %1887 = vmatpush1.msra.mxu0 0.0
  %1888 = vmatprep.subr.mxu0 0.0
  %1889 = vmatpush1.msra.mxu0 0.0
  %1890 = vmatprep.subr.mxu0 0.0
  %1891 = vmatpush1.msra.mxu0 0.0
  %1892 = vmatprep.subr.mxu0 0.0
  %1893 = vmatpush1.msra.mxu0 0.0
  %1894 = vmatprep.subr.mxu0 0.0
  %1895 = vmatpush1.msra.mxu0 0.0
  %1896 = vmatprep.subr.mxu0 0.0
  %1897 = vmatpush1.msra.mxu0 0.0
  %1898 = vmatprep.subr.mxu0 0.0
  %1899 = vmatpush1.msra.mxu0 0.0
  %1900 = vmatprep.subr.mxu0 0.0
  %1901 = vmatpush1.msra.mxu0 0.0
  %1902 = vmatprep.subr.mxu0 0.0
  %1903 = vmatpush1.msra.mxu0 0.0
  %1904 = vmatprep.subr.mxu0 0.0
  %1905 = vmatpush1.msra.mxu0 0.0
  %1906 = vmatprep.subr.mxu0 0.0
  %1907 = vmatpush1.msra.mxu0 0.0
  %1908 = vmatprep.subr.mxu0 0.0
  %1909 = vmatpush1.msra.mxu0 0.0
  %1910 = vmatprep.subr.mxu0 0.0
  %1911 = vmatpush1.msra.mxu0 0.0
  %1912 = vmatprep.subr.mxu0 0.0
  %1913 = vmatpush1.msra.mxu0 0.0
  %1914 = vmatprep.subr.mxu0 0.0
  %1915 = vmatpush1.msra.mxu0 0.0
  %1916 = vmatprep.mubr.f32.mxu0 0.0
  %1917 = vmatmul.mubr.f32.gmra.mrb[0].mxu0 %v1850
  %v1918 = vpop.f32.mrb[0].mxu0
  %v1919 = vadd.f32 0.0, %v1918
  %v1920 = vpop.f32.mrb[0].mxu0
  %1921 = vdwg.mxu0
  %v1923 = vrot.slane %v1919, 3
  %v1924 = vrot.slane %v1919, 4
  %v1925 = vrot.slane %v1919, 5
  %v1926 = vrot.slane %v1919, 6
  %v1927 = vrot.slane %v1919, 7
  %v1928 = vrot.slane %v1919, 1
  %v1929 = vrot.slane %v1919, 2
  %v1938 = vadd.f32 %v143, %v1923
  %v1939 = vadd.f32 %v148, %v1924
  %v1940 = vadd.f32 %v153, %v1925
  %v1941 = vadd.f32 %v158, %v1926
  %v1942 = vadd.f32 %v163, %v1927
  %v1943 = vadd.f32 %v168, %v1919
  %v1944 = vadd.f32 %v173, %v1928
  %v1945 = vadd.f32 %v178, %v1929
  %v1946 = vxor.u32 %v1938, 2147483648
  %v1947 = vxor.u32 %v1939, 2147483648
  %v1948 = vxor.u32 %v1940, 2147483648
  %v1949 = vxor.u32 %v1941, 2147483648
  %v1950 = vxor.u32 %v1942, 2147483648
  %v1951 = vxor.u32 %v1943, 2147483648
  %v1952 = vxor.u32 %v1944, 2147483648
  %v1953 = vxor.u32 %v1945, 2147483648
  %v1954 = vmul.f32 %v1946, 1.442695
  %v1955 = vpow.pop %v1954
  %v1956 = vmul.f32 %v1947, 1.442695
  %v1957 = vpow.pop %v1956
  %v1958 = vmul.f32 %v1948, 1.442695
  %v1959 = vpow.pop %v1958
  %v1960 = vmul.f32 %v1949, 1.442695
  %v1961 = vpow.pop %v1960
  %v1962 = vmul.f32 %v1950, 1.442695
  %v1963 = vpow.pop %v1962
  %v1964 = vmul.f32 %v1951, 1.442695
  %v1965 = vpow.pop %v1964
  %v1966 = vmul.f32 %v1952, 1.442695
  %v1967 = vpow.pop %v1966
  %v1968 = vmul.f32 %v1953, 1.442695
  %v1969 = vpow.pop %v1968
  %v1970 = vadd.f32 %v1955, 1.0
  %v1971 = vadd.f32 %v1957, 1.0
  %v1972 = vadd.f32 %v1959, 1.0
  %v1973 = vadd.f32 %v1961, 1.0
  %v1974 = vadd.f32 %v1963, 1.0
  %v1975 = vadd.f32 %v1965, 1.0
  %v1976 = vadd.f32 %v1967, 1.0
  %v1977 = vadd.f32 %v1969, 1.0
  %v1978 = vrcp.pop %v1970
  %v1979 = vmul.f32 1.0, %v1978
  %v1980 = vrcp.pop %v1971
  %v1981 = vmul.f32 1.0, %v1980
  %v1982 = vrcp.pop %v1972
  %v1983 = vmul.f32 1.0, %v1982
  %v1984 = vrcp.pop %v1973
  %v1985 = vmul.f32 1.0, %v1984
  %v1986 = vrcp.pop %v1974
  %v1987 = vmul.f32 1.0, %v1986
  %v1988 = vrcp.pop %v1975
  %v1989 = vmul.f32 1.0, %v1988
  %v1990 = vrcp.pop %v1976
  %v1991 = vmul.f32 1.0, %v1990
  %v1992 = vrcp.pop %v1977
  %v1993 = vmul.f32 1.0, %v1992
  %v1994 = vtanh.pop %v1938
  %v1995 = vtanh.pop %v1939
  %v1996 = vtanh.pop %v1940
  %v1997 = vtanh.pop %v1941
  %v1998 = vtanh.pop %v1942
  %v1999 = vtanh.pop %v1943
  %v2000 = vtanh.pop %v1944
  %v2001 = vtanh.pop %v1945
  %v2010 = vrot.slane %v1770, 7
  %v2011 = vrot.slane %v1771, 7
  %v2012 = vrot.slane %v1772, 7
  %v2013 = vrot.slane %v1773, 7
  %v2014 = vrot.slane %v1774, 7
  %v2015 = vrot.slane %v1775, 7
  %v2016 = vrot.slane %v1776, 7
  %v2017 = vrot.slane %v1777, 7
  %v2026 = vmul.f32 %v1979, %v2010
  %v2027 = vmul.f32 %v1981, %v2011
  %v2028 = vmul.f32 %v1983, %v2012
  %v2029 = vmul.f32 %v1985, %v2013
  %v2030 = vmul.f32 %v1987, %v2014
  %v2031 = vmul.f32 %v1989, %v2015
  %v2032 = vmul.f32 %v1991, %v2016
  %v2033 = vmul.f32 %v1993, %v2017
  %2042 = vrot.lane.b32.xlu0 %v1994, 64
  %v2043 = vpop.permute.xlu0 %2042
  %2044 = vrot.lane.b32.xlu0 %v1995, 64
  %v2045 = vpop.permute.xlu0 %2044
  %2046 = vrot.lane.b32.xlu0 %v1996, 64
  %v2047 = vpop.permute.xlu0 %2046
  %2048 = vrot.lane.b32.xlu0 %v1997, 64
  %v2049 = vpop.permute.xlu0 %2048
  %2050 = vrot.lane.b32.xlu0 %v1998, 64
  %v2051 = vpop.permute.xlu0 %2050
  %2052 = vrot.lane.b32.xlu0 %v1999, 64
  %v2053 = vpop.permute.xlu0 %2052
  %2054 = vrot.lane.b32.xlu0 %v2000, 64
  %v2055 = vpop.permute.xlu0 %2054
  %2056 = vrot.lane.b32.xlu0 %v2001, 64
  %v2057 = vpop.permute.xlu0 %2056
  %v2066 = vmul.f32 %v1979, %v2043
  %v2067 = vmul.f32 %v1981, %v2045
  %v2068 = vmul.f32 %v1983, %v2047
  %v2069 = vmul.f32 %v1985, %v2049
  %v2070 = vmul.f32 %v1987, %v2051
  %v2071 = vmul.f32 %v1989, %v2053
  %v2072 = vmul.f32 %v1991, %v2055
  %v2073 = vmul.f32 %v1993, %v2057
  %2082 = vrot.lane.b32.xlu0 %v2066, 32
  %v2083 = vpop.permute.xlu0 %2082
  %2084 = vrot.lane.b32.xlu0 %v2067, 32
  %v2085 = vpop.permute.xlu0 %2084
  %2086 = vrot.lane.b32.xlu0 %v2068, 32
  %v2087 = vpop.permute.xlu0 %2086
  %2088 = vrot.lane.b32.xlu0 %v2069, 32
  %v2089 = vpop.permute.xlu0 %2088
  %2090 = vrot.lane.b32.xlu0 %v2070, 32
  %v2091 = vpop.permute.xlu0 %2090
  %2092 = vrot.lane.b32.xlu0 %v2071, 32
  %v2093 = vpop.permute.xlu0 %2092
  %2094 = vrot.lane.b32.xlu0 %v2072, 32
  %v2095 = vpop.permute.xlu0 %2094
  %2096 = vrot.lane.b32.xlu0 %v2073, 32
  %v2097 = vpop.permute.xlu0 %2096
  %v2106 = vadd.f32 %v2026, %v2083
  %v2107 = vadd.f32 %v2027, %v2085
  %v2108 = vadd.f32 %v2028, %v2087
  %v2109 = vadd.f32 %v2029, %v2089
  %v2110 = vadd.f32 %v2030, %v2091
  %v2111 = vadd.f32 %v2031, %v2093
  %v2112 = vadd.f32 %v2032, %v2095
  %v2113 = vadd.f32 %v2033, %v2097
  %v2114 = vtanh.pop %v2106
  %v2115 = vtanh.pop %v2107
  %v2116 = vtanh.pop %v2108
  %v2117 = vtanh.pop %v2109
  %v2118 = vtanh.pop %v2110
  %v2119 = vtanh.pop %v2111
  %v2120 = vtanh.pop %v2112
  %v2121 = vtanh.pop %v2113
  %2130 = vrot.lane.b32.xlu0 %v2114, 64
  %v2131 = vpop.permute.xlu0 %2130
  %2132 = vrot.lane.b32.xlu0 %v2115, 64
  %v2133 = vpop.permute.xlu0 %2132
  %2134 = vrot.lane.b32.xlu0 %v2116, 64
  %v2135 = vpop.permute.xlu0 %2134
  %2136 = vrot.lane.b32.xlu0 %v2117, 64
  %v2137 = vpop.permute.xlu0 %2136
  %2138 = vrot.lane.b32.xlu0 %v2118, 64
  %v2139 = vpop.permute.xlu0 %2138
  %2140 = vrot.lane.b32.xlu0 %v2119, 64
  %v2141 = vpop.permute.xlu0 %2140
  %2142 = vrot.lane.b32.xlu0 %v2120, 64
  %v2143 = vpop.permute.xlu0 %2142
  %2144 = vrot.lane.b32.xlu0 %v2121, 64
  %v2145 = vpop.permute.xlu0 %2144
  %v2154 = vmul.f32 %v1979, %v2131
  %v2155 = vmul.f32 %v1981, %v2133
  %v2156 = vmul.f32 %v1983, %v2135
  %v2157 = vmul.f32 %v1985, %v2137
  %v2158 = vmul.f32 %v1987, %v2139
  %v2159 = vmul.f32 %v1989, %v2141
  %v2160 = vmul.f32 %v1991, %v2143
  %v2161 = vmul.f32 %v1993, %v2145
  %v2170 = vrot.slane %v2154, 5
  %v2171 = vrot.slane %v2155, 4
  %v2172 = vsel %vm484, %v2171, %v2170
  %v2173 = vrot.slane %v2156, 3
  %v2174 = vsel %vm487, %v2173, %v2172
  %v2175 = vrot.slane %v2157, 2
  %v2176 = vsel %vm490, %v2175, %v2174
  %v2177 = vrot.slane %v2158, 1
  %v2178 = vsel %vm493, %v2177, %v2176
  %v2179 = vsel %vm496, %v2159, %v2178
  %v2180 = vrot.slane %v2160, 7
  %v2181 = vsel %vm499, %v2180, %v2179
  %v2182 = vrot.slane %v2161, 6
  %v2183 = vsel %vm502, %v2182, %v2181
  %2184 = vrot.lane.b32.xlu0 %v2183, 32
  %v2185 = vpop.permute.xlu0 %2184
  %v2186 = vsel %vm185, %v2185, 0
  %2188 = vmatprep.subr.mxu0 0.0
  %2189 = vmatpush1.msra.mxu0 %v181
  %2190 = vmatprep.subr.mxu0 0.0
  %2191 = vmatpush1.msra.mxu0 %v182
  %2192 = vmatprep.subr.mxu0 0.0
  %2193 = vmatpush1.msra.mxu0 %v183
  %2194 = vmatprep.subr.mxu0 0.0
  %2195 = vmatpush1.msra.mxu0 %v184
  %2196 = vmatprep.subr.mxu0 0.0
  %2197 = vmatpush1.msra.mxu0 0.0
  %2198 = vmatprep.subr.mxu0 0.0
  %2199 = vmatpush1.msra.mxu0 0.0
  %2200 = vmatprep.subr.mxu0 0.0
  %2201 = vmatpush1.msra.mxu0 0.0
  %2202 = vmatprep.subr.mxu0 0.0
  %2203 = vmatpush1.msra.mxu0 0.0
  %2204 = vmatprep.subr.mxu0 0.0
  %2205 = vmatpush1.msra.mxu0 0.0
  %2206 = vmatprep.subr.mxu0 0.0
  %2207 = vmatpush1.msra.mxu0 0.0
  %2208 = vmatprep.subr.mxu0 0.0
  %2209 = vmatpush1.msra.mxu0 0.0
  %2210 = vmatprep.subr.mxu0 0.0
  %2211 = vmatpush1.msra.mxu0 0.0
  %2212 = vmatprep.subr.mxu0 0.0
  %2213 = vmatpush1.msra.mxu0 0.0
  %2214 = vmatprep.subr.mxu0 0.0
  %2215 = vmatpush1.msra.mxu0 0.0
  %2216 = vmatprep.subr.mxu0 0.0
  %2217 = vmatpush1.msra.mxu0 0.0
  %2218 = vmatprep.subr.mxu0 0.0
  %2219 = vmatpush1.msra.mxu0 0.0
  %2220 = vmatprep.subr.mxu0 0.0
  %2221 = vmatpush1.msra.mxu0 0.0
  %2222 = vmatprep.subr.mxu0 0.0
  %2223 = vmatpush1.msra.mxu0 0.0
  %2224 = vmatprep.subr.mxu0 0.0
  %2225 = vmatpush1.msra.mxu0 0.0
  %2226 = vmatprep.subr.mxu0 0.0
  %2227 = vmatpush1.msra.mxu0 0.0
  %2228 = vmatprep.subr.mxu0 0.0
  %2229 = vmatpush1.msra.mxu0 0.0
  %2230 = vmatprep.subr.mxu0 0.0
  %2231 = vmatpush1.msra.mxu0 0.0
  %2232 = vmatprep.subr.mxu0 0.0
  %2233 = vmatpush1.msra.mxu0 0.0
  %2234 = vmatprep.subr.mxu0 0.0
  %2235 = vmatpush1.msra.mxu0 0.0
  %2236 = vmatprep.subr.mxu0 0.0
  %2237 = vmatpush1.msra.mxu0 0.0
  %2238 = vmatprep.subr.mxu0 0.0
  %2239 = vmatpush1.msra.mxu0 0.0
  %2240 = vmatprep.subr.mxu0 0.0
  %2241 = vmatpush1.msra.mxu0 0.0
  %2242 = vmatprep.subr.mxu0 0.0
  %2243 = vmatpush1.msra.mxu0 0.0
  %2244 = vmatprep.subr.mxu0 0.0
  %2245 = vmatpush1.msra.mxu0 0.0
  %2246 = vmatprep.subr.mxu0 0.0
  %2247 = vmatpush1.msra.mxu0 0.0
  %2248 = vmatprep.subr.mxu0 0.0
  %2249 = vmatpush1.msra.mxu0 0.0
  %2250 = vmatprep.subr.mxu0 0.0
  %2251 = vmatpush1.msra.mxu0 0.0
  %2252 = vmatprep.mubr.f32.mxu0 0.0
  %2253 = vmatmul.mubr.f32.gmra.mrb[0].mxu0 %v2186
  %v2254 = vpop.f32.mrb[0].mxu0
  %v2255 = vadd.f32 0.0, %v2254
  %v2256 = vpop.f32.mrb[0].mxu0
  %2257 = vdwg.mxu0
  %v2259 = vrot.slane %v2255, 2
  %v2260 = vrot.slane %v2255, 3
  %v2261 = vrot.slane %v2255, 4
  %v2262 = vrot.slane %v2255, 5
  %v2263 = vrot.slane %v2255, 6
  %v2264 = vrot.slane %v2255, 7
  %v2265 = vrot.slane %v2255, 1
  %v2274 = vadd.f32 %v143, %v2259
  %v2275 = vadd.f32 %v148, %v2260
  %v2276 = vadd.f32 %v153, %v2261
  %v2277 = vadd.f32 %v158, %v2262
  %v2278 = vadd.f32 %v163, %v2263
  %v2279 = vadd.f32 %v168, %v2264
  %v2280 = vadd.f32 %v173, %v2255
  %v2281 = vadd.f32 %v178, %v2265
  %v2282 = vxor.u32 %v2274, 2147483648
  %v2283 = vxor.u32 %v2275, 2147483648
  %v2284 = vxor.u32 %v2276, 2147483648
  %v2285 = vxor.u32 %v2277, 2147483648
  %v2286 = vxor.u32 %v2278, 2147483648
  %v2287 = vxor.u32 %v2279, 2147483648
  %v2288 = vxor.u32 %v2280, 2147483648
  %v2289 = vxor.u32 %v2281, 2147483648
  %v2290 = vmul.f32 %v2282, 1.442695
  %v2291 = vpow.pop %v2290
  %v2292 = vmul.f32 %v2283, 1.442695
  %v2293 = vpow.pop %v2292
  %v2294 = vmul.f32 %v2284, 1.442695
  %v2295 = vpow.pop %v2294
  %v2296 = vmul.f32 %v2285, 1.442695
  %v2297 = vpow.pop %v2296
  %v2298 = vmul.f32 %v2286, 1.442695
  %v2299 = vpow.pop %v2298
  %v2300 = vmul.f32 %v2287, 1.442695
  %v2301 = vpow.pop %v2300
  %v2302 = vmul.f32 %v2288, 1.442695
  %v2303 = vpow.pop %v2302
  %v2304 = vmul.f32 %v2289, 1.442695
  %v2305 = vpow.pop %v2304
  %v2306 = vadd.f32 %v2291, 1.0
  %v2307 = vadd.f32 %v2293, 1.0
  %v2308 = vadd.f32 %v2295, 1.0
  %v2309 = vadd.f32 %v2297, 1.0
  %v2310 = vadd.f32 %v2299, 1.0
  %v2311 = vadd.f32 %v2301, 1.0
  %v2312 = vadd.f32 %v2303, 1.0
  %v2313 = vadd.f32 %v2305, 1.0
  %v2314 = vrcp.pop %v2306
  %v2315 = vmul.f32 1.0, %v2314
  %v2316 = vrcp.pop %v2307
  %v2317 = vmul.f32 1.0, %v2316
  %v2318 = vrcp.pop %v2308
  %v2319 = vmul.f32 1.0, %v2318
  %v2320 = vrcp.pop %v2309
  %v2321 = vmul.f32 1.0, %v2320
  %v2322 = vrcp.pop %v2310
  %v2323 = vmul.f32 1.0, %v2322
  %v2324 = vrcp.pop %v2311
  %v2325 = vmul.f32 1.0, %v2324
  %v2326 = vrcp.pop %v2312
  %v2327 = vmul.f32 1.0, %v2326
  %v2328 = vrcp.pop %v2313
  %v2329 = vmul.f32 1.0, %v2328
  %v2330 = vtanh.pop %v2274
  %v2331 = vtanh.pop %v2275
  %v2332 = vtanh.pop %v2276
  %v2333 = vtanh.pop %v2277
  %v2334 = vtanh.pop %v2278
  %v2335 = vtanh.pop %v2279
  %v2336 = vtanh.pop %v2280
  %v2337 = vtanh.pop %v2281
  %v2346 = vrot.slane %v2106, 7
  %v2347 = vrot.slane %v2107, 7
  %v2348 = vrot.slane %v2108, 7
  %v2349 = vrot.slane %v2109, 7
  %v2350 = vrot.slane %v2110, 7
  %v2351 = vrot.slane %v2111, 7
  %v2352 = vrot.slane %v2112, 7
  %v2353 = vrot.slane %v2113, 7
  %v2362 = vmul.f32 %v2315, %v2346
  %v2363 = vmul.f32 %v2317, %v2347
  %v2364 = vmul.f32 %v2319, %v2348
  %v2365 = vmul.f32 %v2321, %v2349
  %v2366 = vmul.f32 %v2323, %v2350
  %v2367 = vmul.f32 %v2325, %v2351
  %v2368 = vmul.f32 %v2327, %v2352
  %v2369 = vmul.f32 %v2329, %v2353
  %2378 = vrot.lane.b32.xlu0 %v2330, 64
  %v2379 = vpop.permute.xlu0 %2378
  %2380 = vrot.lane.b32.xlu0 %v2331, 64
  %v2381 = vpop.permute.xlu0 %2380
  %2382 = vrot.lane.b32.xlu0 %v2332, 64
  %v2383 = vpop.permute.xlu0 %2382
  %2384 = vrot.lane.b32.xlu0 %v2333, 64
  %v2385 = vpop.permute.xlu0 %2384
  %2386 = vrot.lane.b32.xlu0 %v2334, 64
  %v2387 = vpop.permute.xlu0 %2386
  %2388 = vrot.lane.b32.xlu0 %v2335, 64
  %v2389 = vpop.permute.xlu0 %2388
  %2390 = vrot.lane.b32.xlu0 %v2336, 64
  %v2391 = vpop.permute.xlu0 %2390
  %2392 = vrot.lane.b32.xlu0 %v2337, 64
  %v2393 = vpop.permute.xlu0 %2392
  %v2402 = vmul.f32 %v2315, %v2379
  %v2403 = vmul.f32 %v2317, %v2381
  %v2404 = vmul.f32 %v2319, %v2383
  %v2405 = vmul.f32 %v2321, %v2385
  %v2406 = vmul.f32 %v2323, %v2387
  %v2407 = vmul.f32 %v2325, %v2389
  %v2408 = vmul.f32 %v2327, %v2391
  %v2409 = vmul.f32 %v2329, %v2393
  %2418 = vrot.lane.b32.xlu0 %v2402, 32
  %v2419 = vpop.permute.xlu0 %2418
  %2420 = vrot.lane.b32.xlu0 %v2403, 32
  %v2421 = vpop.permute.xlu0 %2420
  %2422 = vrot.lane.b32.xlu0 %v2404, 32
  %v2423 = vpop.permute.xlu0 %2422
  %2424 = vrot.lane.b32.xlu0 %v2405, 32
  %v2425 = vpop.permute.xlu0 %2424
  %2426 = vrot.lane.b32.xlu0 %v2406, 32
  %v2427 = vpop.permute.xlu0 %2426
  %2428 = vrot.lane.b32.xlu0 %v2407, 32
  %v2429 = vpop.permute.xlu0 %2428
  %2430 = vrot.lane.b32.xlu0 %v2408, 32
  %v2431 = vpop.permute.xlu0 %2430
  %2432 = vrot.lane.b32.xlu0 %v2409, 32
  %v2433 = vpop.permute.xlu0 %2432
  %v2442 = vadd.f32 %v2362, %v2419
  %v2443 = vadd.f32 %v2363, %v2421
  %v2444 = vadd.f32 %v2364, %v2423
  %v2445 = vadd.f32 %v2365, %v2425
  %v2446 = vadd.f32 %v2366, %v2427
  %v2447 = vadd.f32 %v2367, %v2429
  %v2448 = vadd.f32 %v2368, %v2431
  %v2449 = vadd.f32 %v2369, %v2433
  %v2450 = vtanh.pop %v2442
  %v2451 = vtanh.pop %v2443
  %v2452 = vtanh.pop %v2444
  %v2453 = vtanh.pop %v2445
  %v2454 = vtanh.pop %v2446
  %v2455 = vtanh.pop %v2447
  %v2456 = vtanh.pop %v2448
  %v2457 = vtanh.pop %v2449
  %2466 = vrot.lane.b32.xlu0 %v2450, 64
  %v2467 = vpop.permute.xlu0 %2466
  %2468 = vrot.lane.b32.xlu0 %v2451, 64
  %v2469 = vpop.permute.xlu0 %2468
  %2470 = vrot.lane.b32.xlu0 %v2452, 64
  %v2471 = vpop.permute.xlu0 %2470
  %2472 = vrot.lane.b32.xlu0 %v2453, 64
  %v2473 = vpop.permute.xlu0 %2472
  %2474 = vrot.lane.b32.xlu0 %v2454, 64
  %v2475 = vpop.permute.xlu0 %2474
  %2476 = vrot.lane.b32.xlu0 %v2455, 64
  %v2477 = vpop.permute.xlu0 %2476
  %2478 = vrot.lane.b32.xlu0 %v2456, 64
  %v2479 = vpop.permute.xlu0 %2478
  %2480 = vrot.lane.b32.xlu0 %v2457, 64
  %v2481 = vpop.permute.xlu0 %2480
  %v2490 = vmul.f32 %v2315, %v2467
  %v2491 = vmul.f32 %v2317, %v2469
  %v2492 = vmul.f32 %v2319, %v2471
  %v2493 = vmul.f32 %v2321, %v2473
  %v2494 = vmul.f32 %v2323, %v2475
  %v2495 = vmul.f32 %v2325, %v2477
  %v2496 = vmul.f32 %v2327, %v2479
  %v2497 = vmul.f32 %v2329, %v2481
  %v2506 = vrot.slane %v2490, 6
  %v2507 = vrot.slane %v2491, 5
  %v2508 = vsel %vm484, %v2507, %v2506
  %v2509 = vrot.slane %v2492, 4
  %v2510 = vsel %vm487, %v2509, %v2508
  %v2511 = vrot.slane %v2493, 3
  %v2512 = vsel %vm490, %v2511, %v2510
  %v2513 = vrot.slane %v2494, 2
  %v2514 = vsel %vm493, %v2513, %v2512
  %v2515 = vrot.slane %v2495, 1
  %v2516 = vsel %vm496, %v2515, %v2514
  %v2517 = vsel %vm499, %v2496, %v2516
  %v2518 = vrot.slane %v2497, 7
  %v2519 = vsel %vm502, %v2518, %v2517
  %2520 = vrot.lane.b32.xlu0 %v2519, 32
  %v2521 = vpop.permute.xlu0 %2520
  %v2522 = vsel %vm185, %v2521, 0
  %2524 = vmatprep.subr.mxu0 0.0
  %2525 = vmatpush1.msra.mxu0 %v181
  %2526 = vmatprep.subr.mxu0 0.0
  %2527 = vmatpush1.msra.mxu0 %v182
  %2528 = vmatprep.subr.mxu0 0.0
  %2529 = vmatpush1.msra.mxu0 %v183
  %2530 = vmatprep.subr.mxu0 0.0
  %2531 = vmatpush1.msra.mxu0 %v184
  %2532 = vmatprep.subr.mxu0 0.0
  %2533 = vmatpush1.msra.mxu0 0.0
  %2534 = vmatprep.subr.mxu0 0.0
  %2535 = vmatpush1.msra.mxu0 0.0
  %2536 = vmatprep.subr.mxu0 0.0
  %2537 = vmatpush1.msra.mxu0 0.0
  %2538 = vmatprep.subr.mxu0 0.0
  %2539 = vmatpush1.msra.mxu0 0.0
  %2540 = vmatprep.subr.mxu0 0.0
  %2541 = vmatpush1.msra.mxu0 0.0
  %2542 = vmatprep.subr.mxu0 0.0
  %2543 = vmatpush1.msra.mxu0 0.0
  %2544 = vmatprep.subr.mxu0 0.0
  %2545 = vmatpush1.msra.mxu0 0.0
  %2546 = vmatprep.subr.mxu0 0.0
  %2547 = vmatpush1.msra.mxu0 0.0
  %2548 = vmatprep.subr.mxu0 0.0
  %2549 = vmatpush1.msra.mxu0 0.0
  %2550 = vmatprep.subr.mxu0 0.0
  %2551 = vmatpush1.msra.mxu0 0.0
  %2552 = vmatprep.subr.mxu0 0.0
  %2553 = vmatpush1.msra.mxu0 0.0
  %2554 = vmatprep.subr.mxu0 0.0
  %2555 = vmatpush1.msra.mxu0 0.0
  %2556 = vmatprep.subr.mxu0 0.0
  %2557 = vmatpush1.msra.mxu0 0.0
  %2558 = vmatprep.subr.mxu0 0.0
  %2559 = vmatpush1.msra.mxu0 0.0
  %2560 = vmatprep.subr.mxu0 0.0
  %2561 = vmatpush1.msra.mxu0 0.0
  %2562 = vmatprep.subr.mxu0 0.0
  %2563 = vmatpush1.msra.mxu0 0.0
  %2564 = vmatprep.subr.mxu0 0.0
  %2565 = vmatpush1.msra.mxu0 0.0
  %2566 = vmatprep.subr.mxu0 0.0
  %2567 = vmatpush1.msra.mxu0 0.0
  %2568 = vmatprep.subr.mxu0 0.0
  %2569 = vmatpush1.msra.mxu0 0.0
  %2570 = vmatprep.subr.mxu0 0.0
  %2571 = vmatpush1.msra.mxu0 0.0
  %2572 = vmatprep.subr.mxu0 0.0
  %2573 = vmatpush1.msra.mxu0 0.0
  %2574 = vmatprep.subr.mxu0 0.0
  %2575 = vmatpush1.msra.mxu0 0.0
  %2576 = vmatprep.subr.mxu0 0.0
  %2577 = vmatpush1.msra.mxu0 0.0
  %2578 = vmatprep.subr.mxu0 0.0
  %2579 = vmatpush1.msra.mxu0 0.0
  %2580 = vmatprep.subr.mxu0 0.0
  %2581 = vmatpush1.msra.mxu0 0.0
  %2582 = vmatprep.subr.mxu0 0.0
  %2583 = vmatpush1.msra.mxu0 0.0
  %2584 = vmatprep.subr.mxu0 0.0
  %2585 = vmatpush1.msra.mxu0 0.0
  %2586 = vmatprep.subr.mxu0 0.0
  %2587 = vmatpush1.msra.mxu0 0.0
  %2588 = vmatprep.mubr.f32.mxu0 0.0
  %2589 = vmatmul.mubr.f32.gmra.mrb[0].mxu0 %v2522
  %v2590 = vpop.f32.mrb[0].mxu0
  %v2591 = vadd.f32 0.0, %v2590
  %v2592 = vpop.f32.mrb[0].mxu0
  %2593 = vdwg.mxu0
  %v2595 = vrot.slane %v2591, 1
  %v2596 = vrot.slane %v2591, 2
  %v2597 = vrot.slane %v2591, 3
  %v2598 = vrot.slane %v2591, 4
  %v2599 = vrot.slane %v2591, 5
  %v2600 = vrot.slane %v2591, 6
  %v2601 = vrot.slane %v2591, 7
  %v2610 = vadd.f32 %v143, %v2595
  %v2611 = vadd.f32 %v148, %v2596
  %v2612 = vadd.f32 %v153, %v2597
  %v2613 = vadd.f32 %v158, %v2598
  %v2614 = vadd.f32 %v163, %v2599
  %v2615 = vadd.f32 %v168, %v2600
  %v2616 = vadd.f32 %v173, %v2601
  %v2617 = vadd.f32 %v178, %v2591
  %v2618 = vxor.u32 %v2610, 2147483648
  %v2619 = vxor.u32 %v2611, 2147483648
  %v2620 = vxor.u32 %v2612, 2147483648
  %v2621 = vxor.u32 %v2613, 2147483648
  %v2622 = vxor.u32 %v2614, 2147483648
  %v2623 = vxor.u32 %v2615, 2147483648
  %v2624 = vxor.u32 %v2616, 2147483648
  %v2625 = vxor.u32 %v2617, 2147483648
  %v2626 = vmul.f32 %v2618, 1.442695
  %v2627 = vpow.pop %v2626
  %v2628 = vmul.f32 %v2619, 1.442695
  %v2629 = vpow.pop %v2628
  %v2630 = vmul.f32 %v2620, 1.442695
  %v2631 = vpow.pop %v2630
  %v2632 = vmul.f32 %v2621, 1.442695
  %v2633 = vpow.pop %v2632
  %v2634 = vmul.f32 %v2622, 1.442695
  %v2635 = vpow.pop %v2634
  %v2636 = vmul.f32 %v2623, 1.442695
  %v2637 = vpow.pop %v2636
  %v2638 = vmul.f32 %v2624, 1.442695
  %v2639 = vpow.pop %v2638
  %v2640 = vmul.f32 %v2625, 1.442695
  %v2641 = vpow.pop %v2640
  %v2642 = vadd.f32 %v2627, 1.0
  %v2643 = vadd.f32 %v2629, 1.0
  %v2644 = vadd.f32 %v2631, 1.0
  %v2645 = vadd.f32 %v2633, 1.0
  %v2646 = vadd.f32 %v2635, 1.0
  %v2647 = vadd.f32 %v2637, 1.0
  %v2648 = vadd.f32 %v2639, 1.0
  %v2649 = vadd.f32 %v2641, 1.0
  %v2650 = vrcp.pop %v2642
  %v2651 = vmul.f32 1.0, %v2650
  %v2652 = vrcp.pop %v2643
  %v2653 = vmul.f32 1.0, %v2652
  %v2654 = vrcp.pop %v2644
  %v2655 = vmul.f32 1.0, %v2654
  %v2656 = vrcp.pop %v2645
  %v2657 = vmul.f32 1.0, %v2656
  %v2658 = vrcp.pop %v2646
  %v2659 = vmul.f32 1.0, %v2658
  %v2660 = vrcp.pop %v2647
  %v2661 = vmul.f32 1.0, %v2660
  %v2662 = vrcp.pop %v2648
  %v2663 = vmul.f32 1.0, %v2662
  %v2664 = vrcp.pop %v2649
  %v2665 = vmul.f32 1.0, %v2664
  %v2666 = vtanh.pop %v2610
  %v2667 = vtanh.pop %v2611
  %v2668 = vtanh.pop %v2612
  %v2669 = vtanh.pop %v2613
  %v2670 = vtanh.pop %v2614
  %v2671 = vtanh.pop %v2615
  %v2672 = vtanh.pop %v2616
  %v2673 = vtanh.pop %v2617
  %v2682 = vrot.slane %v2442, 7
  %v2683 = vrot.slane %v2443, 7
  %v2684 = vrot.slane %v2444, 7
  %v2685 = vrot.slane %v2445, 7
  %v2686 = vrot.slane %v2446, 7
  %v2687 = vrot.slane %v2447, 7
  %v2688 = vrot.slane %v2448, 7
  %v2689 = vrot.slane %v2449, 7
  %v2698 = vmul.f32 %v2651, %v2682
  %v2699 = vmul.f32 %v2653, %v2683
  %v2700 = vmul.f32 %v2655, %v2684
  %v2701 = vmul.f32 %v2657, %v2685
  %v2702 = vmul.f32 %v2659, %v2686
  %v2703 = vmul.f32 %v2661, %v2687
  %v2704 = vmul.f32 %v2663, %v2688
  %v2705 = vmul.f32 %v2665, %v2689
  %2714 = vrot.lane.b32.xlu0 %v2666, 64
  %v2715 = vpop.permute.xlu0 %2714
  %2716 = vrot.lane.b32.xlu0 %v2667, 64
  %v2717 = vpop.permute.xlu0 %2716
  %2718 = vrot.lane.b32.xlu0 %v2668, 64
  %v2719 = vpop.permute.xlu0 %2718
  %2720 = vrot.lane.b32.xlu0 %v2669, 64
  %v2721 = vpop.permute.xlu0 %2720
  %2722 = vrot.lane.b32.xlu0 %v2670, 64
  %v2723 = vpop.permute.xlu0 %2722
  %2724 = vrot.lane.b32.xlu0 %v2671, 64
  %v2725 = vpop.permute.xlu0 %2724
  %2726 = vrot.lane.b32.xlu0 %v2672, 64
  %v2727 = vpop.permute.xlu0 %2726
  %2728 = vrot.lane.b32.xlu0 %v2673, 64
  %v2729 = vpop.permute.xlu0 %2728
  %v2738 = vmul.f32 %v2651, %v2715
  %v2739 = vmul.f32 %v2653, %v2717
  %v2740 = vmul.f32 %v2655, %v2719
  %v2741 = vmul.f32 %v2657, %v2721
  %v2742 = vmul.f32 %v2659, %v2723
  %v2743 = vmul.f32 %v2661, %v2725
  %v2744 = vmul.f32 %v2663, %v2727
  %v2745 = vmul.f32 %v2665, %v2729
  %2754 = vrot.lane.b32.xlu0 %v2738, 32
  %v2755 = vpop.permute.xlu0 %2754
  %2756 = vrot.lane.b32.xlu0 %v2739, 32
  %v2757 = vpop.permute.xlu0 %2756
  %2758 = vrot.lane.b32.xlu0 %v2740, 32
  %v2759 = vpop.permute.xlu0 %2758
  %2760 = vrot.lane.b32.xlu0 %v2741, 32
  %v2761 = vpop.permute.xlu0 %2760
  %2762 = vrot.lane.b32.xlu0 %v2742, 32
  %v2763 = vpop.permute.xlu0 %2762
  %2764 = vrot.lane.b32.xlu0 %v2743, 32
  %v2765 = vpop.permute.xlu0 %2764
  %2766 = vrot.lane.b32.xlu0 %v2744, 32
  %v2767 = vpop.permute.xlu0 %2766
  %2768 = vrot.lane.b32.xlu0 %v2745, 32
  %v2769 = vpop.permute.xlu0 %2768
  %v2778 = vadd.f32 %v2698, %v2755
  %v2779 = vadd.f32 %v2699, %v2757
  %v2780 = vadd.f32 %v2700, %v2759
  %v2781 = vadd.f32 %v2701, %v2761
  %v2782 = vadd.f32 %v2702, %v2763
  %v2783 = vadd.f32 %v2703, %v2765
  %v2784 = vadd.f32 %v2704, %v2767
  %v2785 = vadd.f32 %v2705, %v2769
  %v2786 = vtanh.pop %v2778
  %v2787 = vtanh.pop %v2779
  %v2788 = vtanh.pop %v2780
  %v2789 = vtanh.pop %v2781
  %v2790 = vtanh.pop %v2782
  %v2791 = vtanh.pop %v2783
  %v2792 = vtanh.pop %v2784
  %v2793 = vtanh.pop %v2785
  %2802 = vrot.lane.b32.xlu0 %v2786, 64
  %v2803 = vpop.permute.xlu0 %2802
  %2804 = vrot.lane.b32.xlu0 %v2787, 64
  %v2805 = vpop.permute.xlu0 %2804
  %2806 = vrot.lane.b32.xlu0 %v2788, 64
  %v2807 = vpop.permute.xlu0 %2806
  %2808 = vrot.lane.b32.xlu0 %v2789, 64
  %v2809 = vpop.permute.xlu0 %2808
  %2810 = vrot.lane.b32.xlu0 %v2790, 64
  %v2811 = vpop.permute.xlu0 %2810
  %2812 = vrot.lane.b32.xlu0 %v2791, 64
  %v2813 = vpop.permute.xlu0 %2812
  %2814 = vrot.lane.b32.xlu0 %v2792, 64
  %v2815 = vpop.permute.xlu0 %2814
  %2816 = vrot.lane.b32.xlu0 %v2793, 64
  %v2817 = vpop.permute.xlu0 %2816
  %v2826 = vmul.f32 %v2651, %v2803
  %v2827 = vmul.f32 %v2653, %v2805
  %v2828 = vmul.f32 %v2655, %v2807
  %v2829 = vmul.f32 %v2657, %v2809
  %v2830 = vmul.f32 %v2659, %v2811
  %v2831 = vmul.f32 %v2661, %v2813
  %v2832 = vmul.f32 %v2663, %v2815
  %v2833 = vmul.f32 %v2665, %v2817
  %v2834 = vld [vmem:[%s4] sm:$0xff]
  %v2835 = vld [vmem:[%s4 + $0x8] sm:$0xff]
  %v2836 = vld [vmem:[%s4 + $0x10] sm:$0xff]
  %v2837 = vld [vmem:[%s4 + $0x18] sm:$0xff]
  %v2838 = vld [vmem:[%s5] sm:$0x1]
  %v2840 = vlaneseq
  %v2841 = vshrl.u32 %v2840, 7
  %v2842 = vsub.s32 0, %v2841
  %v2843 = vrot.slane %v2838, %v2842
  %v2853 = vrot.slane %v2826, 7
  %v2854 = vrot.slane %v2827, 6
  %v2855 = vsel %vm484, %v2854, %v2853
  %v2856 = vrot.slane %v2828, 5
  %v2857 = vsel %vm487, %v2856, %v2855
  %v2858 = vrot.slane %v2829, 4
  %v2859 = vsel %vm490, %v2858, %v2857
  %v2860 = vrot.slane %v2830, 3
  %v2861 = vsel %vm493, %v2860, %v2859
  %v2862 = vrot.slane %v2831, 2
  %v2863 = vsel %vm496, %v2862, %v2861
  %v2864 = vrot.slane %v2832, 1
  %v2865 = vsel %vm499, %v2864, %v2863
  %v2866 = vsel %vm502, %v2833, %v2865
  %2867 = vrot.lane.b32.xlu0 %v2866, 32
  %v2868 = vpop.permute.xlu0 %2867
  %v2869 = vsel %vm185, %v2868, 0
  %2871 = vmatprep.subr.mxu0 0.0
  %2872 = vmatpush1.msra.mxu0 %v2834
  %2873 = vmatprep.subr.mxu0 0.0
  %2874 = vmatpush1.msra.mxu0 %v2835
  %2875 = vmatprep.subr.mxu0 0.0
  %2876 = vmatpush1.msra.mxu0 %v2836
  %2877 = vmatprep.subr.mxu0 0.0
  %2878 = vmatpush1.msra.mxu0 %v2837
  %2879 = vmatprep.subr.mxu0 0.0
  %2880 = vmatpush1.msra.mxu0 0.0
  %2881 = vmatprep.subr.mxu0 0.0
  %2882 = vmatpush1.msra.mxu0 0.0
  %2883 = vmatprep.subr.mxu0 0.0
  %2884 = vmatpush1.msra.mxu0 0.0
  %2885 = vmatprep.subr.mxu0 0.0
  %2886 = vmatpush1.msra.mxu0 0.0
  %2887 = vmatprep.subr.mxu0 0.0
  %2888 = vmatpush1.msra.mxu0 0.0
  %2889 = vmatprep.subr.mxu0 0.0
  %2890 = vmatpush1.msra.mxu0 0.0
  %2891 = vmatprep.subr.mxu0 0.0
  %2892 = vmatpush1.msra.mxu0 0.0
  %2893 = vmatprep.subr.mxu0 0.0
  %2894 = vmatpush1.msra.mxu0 0.0
  %2895 = vmatprep.subr.mxu0 0.0
  %2896 = vmatpush1.msra.mxu0 0.0
  %2897 = vmatprep.subr.mxu0 0.0
  %2898 = vmatpush1.msra.mxu0 0.0
  %2899 = vmatprep.subr.mxu0 0.0
  %2900 = vmatpush1.msra.mxu0 0.0
  %2901 = vmatprep.subr.mxu0 0.0
  %2902 = vmatpush1.msra.mxu0 0.0
  %2903 = vmatprep.subr.mxu0 0.0
  %2904 = vmatpush1.msra.mxu0 0.0
  %2905 = vmatprep.subr.mxu0 0.0
  %2906 = vmatpush1.msra.mxu0 0.0
  %2907 = vmatprep.subr.mxu0 0.0
  %2908 = vmatpush1.msra.mxu0 0.0
  %2909 = vmatprep.subr.mxu0 0.0
  %2910 = vmatpush1.msra.mxu0 0.0
  %2911 = vmatprep.subr.mxu0 0.0
  %2912 = vmatpush1.msra.mxu0 0.0
  %2913 = vmatprep.subr.mxu0 0.0
  %2914 = vmatpush1.msra.mxu0 0.0
  %2915 = vmatprep.subr.mxu0 0.0
  %2916 = vmatpush1.msra.mxu0 0.0
  %2917 = vmatprep.subr.mxu0 0.0
  %2918 = vmatpush1.msra.mxu0 0.0
  %2919 = vmatprep.subr.mxu0 0.0
  %2920 = vmatpush1.msra.mxu0 0.0
  %2921 = vmatprep.subr.mxu0 0.0
  %2922 = vmatpush1.msra.mxu0 0.0
  %2923 = vmatprep.subr.mxu0 0.0
  %2924 = vmatpush1.msra.mxu0 0.0
  %2925 = vmatprep.subr.mxu0 0.0
  %2926 = vmatpush1.msra.mxu0 0.0
  %2927 = vmatprep.subr.mxu0 0.0
  %2928 = vmatpush1.msra.mxu0 0.0
  %2929 = vmatprep.subr.mxu0 0.0
  %2930 = vmatpush1.msra.mxu0 0.0
  %2931 = vmatprep.subr.mxu0 0.0
  %2932 = vmatpush1.msra.mxu0 0.0
  %2933 = vmatprep.subr.mxu0 0.0
  %2934 = vmatpush1.msra.mxu0 0.0
  %2935 = vmatprep.mubr.f32.mxu0 0.0
  %2936 = vmatmul.mubr.f32.gmra.mrb[0].mxu0 %v2869
  %v2937 = vpop.f32.mrb[0].mxu0
  %v2938 = vadd.f32 %v2843, %v2937
  %v2939 = vpop.f32.mrb[0].mxu0
  %2940 = vdwg.mxu0
  %v2941 = vmax.f32 %v2938, 0.0
  %v2942 = vld [vmem:[%s6] sm:$0xff]
  %v2943 = vld [vmem:[%s6 + $0x8] sm:$0xff]
  %v2944 = vld [vmem:[%s6 + $0x10] sm:$0xff]
  %v2945 = vld [vmem:[%s6 + $0x18] sm:$0xff]
  %v2946 = vld [vmem:[#allocation2] sm:$0x1]
  %v2948 = vlaneseq
  %v2949 = vshrl.u32 %v2948, 7
  %v2950 = vsub.s32 0, %v2949
  %v2951 = vrot.slane %v2946, %v2950
  %v2954 = vsel %vm185, %v2941, 0
  %2956 = vmatprep.subr.mxu0 0.0
  %2957 = vmatpush1.msra.mxu0 %v2942
  %2958 = vmatprep.subr.mxu0 0.0
  %2959 = vmatpush1.msra.mxu0 %v2943
  %2960 = vmatprep.subr.mxu0 0.0
  %2961 = vmatpush1.msra.mxu0 %v2944
  %2962 = vmatprep.subr.mxu0 0.0
  %2963 = vmatpush1.msra.mxu0 %v2945
  %2964 = vmatprep.subr.mxu0 0.0
  %2965 = vmatpush1.msra.mxu0 0.0
  %2966 = vmatprep.subr.mxu0 0.0
  %2967 = vmatpush1.msra.mxu0 0.0
  %2968 = vmatprep.subr.mxu0 0.0
  %2969 = vmatpush1.msra.mxu0 0.0
  %2970 = vmatprep.subr.mxu0 0.0
  %2971 = vmatpush1.msra.mxu0 0.0
  %2972 = vmatprep.subr.mxu0 0.0
  %2973 = vmatpush1.msra.mxu0 0.0
  %2974 = vmatprep.subr.mxu0 0.0
  %2975 = vmatpush1.msra.mxu0 0.0
  %2976 = vmatprep.subr.mxu0 0.0
  %2977 = vmatpush1.msra.mxu0 0.0
  %2978 = vmatprep.subr.mxu0 0.0
  %2979 = vmatpush1.msra.mxu0 0.0
  %2980 = vmatprep.subr.mxu0 0.0
  %2981 = vmatpush1.msra.mxu0 0.0
  %2982 = vmatprep.subr.mxu0 0.0
  %2983 = vmatpush1.msra.mxu0 0.0
  %2984 = vmatprep.subr.mxu0 0.0
  %2985 = vmatpush1.msra.mxu0 0.0
  %2986 = vmatprep.subr.mxu0 0.0
  %2987 = vmatpush1.msra.mxu0 0.0
  %2988 = vmatprep.subr.mxu0 0.0
  %2989 = vmatpush1.msra.mxu0 0.0
  %2990 = vmatprep.subr.mxu0 0.0
  %2991 = vmatpush1.msra.mxu0 0.0
  %2992 = vmatprep.subr.mxu0 0.0
  %2993 = vmatpush1.msra.mxu0 0.0
  %2994 = vmatprep.subr.mxu0 0.0
  %2995 = vmatpush1.msra.mxu0 0.0
  %2996 = vmatprep.subr.mxu0 0.0
  %2997 = vmatpush1.msra.mxu0 0.0
  %2998 = vmatprep.subr.mxu0 0.0
  %2999 = vmatpush1.msra.mxu0 0.0
  %3000 = vmatprep.subr.mxu0 0.0
  %3001 = vmatpush1.msra.mxu0 0.0
  %3002 = vmatprep.subr.mxu0 0.0
  %3003 = vmatpush1.msra.mxu0 0.0
  %3004 = vmatprep.subr.mxu0 0.0
  %3005 = vmatpush1.msra.mxu0 0.0
  %3006 = vmatprep.subr.mxu0 0.0
  %3007 = vmatpush1.msra.mxu0 0.0
  %3008 = vmatprep.subr.mxu0 0.0
  %3009 = vmatpush1.msra.mxu0 0.0
  %3010 = vmatprep.subr.mxu0 0.0
  %3011 = vmatpush1.msra.mxu0 0.0
  %3012 = vmatprep.subr.mxu0 0.0
  %3013 = vmatpush1.msra.mxu0 0.0
  %3014 = vmatprep.subr.mxu0 0.0
  %3015 = vmatpush1.msra.mxu0 0.0
  %3016 = vmatprep.subr.mxu0 0.0
  %3017 = vmatpush1.msra.mxu0 0.0
  %3018 = vmatprep.subr.mxu0 0.0
  %3019 = vmatpush1.msra.mxu0 0.0
  %3020 = vmatprep.mubr.f32.mxu0 0.0
  %3021 = vmatmul.mubr.f32.gmra.mrb[0].mxu0 %v2954
  %v3022 = vpop.f32.mrb[0].mxu0
  %v3023 = vadd.f32 %v2951, %v3022
  %v3024 = vpop.f32.mrb[0].mxu0
  %3025 = vdwg.mxu0
  %vm3026 = vcmask 7168
  %3027 = vst.msk [vmem:[%s8] sm:$0xff] %vm3026, %v3023
  // Predicated region
  $region34: #{tpu_custom_call.1} parent=0 // pred_check
    _
  $region35: #{tpu_custom_call.1} parent=0 // pred_check_branch
    %3029 = sbr.rel (0) target = $region37
  $region36: #{tpu_custom_call.1} parent=0 // pred_region
    _
  $region37: #{tpu_custom_call.1} parent=0 // pred_fallthru
    _
  // Predicated region
  $region38: #{tpu_custom_call.1} parent=0 // pred_check
    _
  $region39: #{tpu_custom_call.1} parent=0 // pred_check_branch
    %3031 = sbr.rel (0) target = $region41
  $region40: #{tpu_custom_call.1} parent=0 // pred_region
    _
  $region41: #{tpu_custom_call.1} parent=0 // pred_fallthru
    _

</llo_original>
